<compile_context>
chip_gen: v7x
topology: tpu7x:2x2x1
jax: 0.10.0
libtpu: 0.0.40
codegen_flags: <defaults>
</compile_context>

<pallas_src>
import functools

import jax
import jax.numpy as jnp
from jax.experimental import pallas as pl
from jax.experimental.pallas import tpu as pltpu


def _rollout_kernel(x0_ref, u_ref, w1x_ref, w1u_ref, b1_ref, w2_ref, b2_ref,
                    xhat_ref, x_carry, *, chunk, btile):
    """One grid step = `chunk` Euler steps for one batch tile of `btile` rows."""
    c = pl.program_id(1)  # time-chunk index (serial / "arbitrary" axis)

    # (Re-)initialize the carried state at the first chunk of each batch tile.
    @pl.when(c == 0)
    def _():
        x_carry[...] = x0_ref[...]

    nu = u_ref.shape[-1]
    nx = w2_ref.shape[-1]

    # Chunk preamble (off the serial recurrence path): project all controls of
    # this chunk with a single matmul:  uproj = u @ W1u + b1 -> (chunk*btile, H).
    u2 = u_ref[...].reshape(chunk * btile, nu)
    uproj = jnp.dot(u2, w1u_ref[...], preferred_element_type=jnp.float32) + b1_ref[...]

    # Weights live in vregs for the whole chunk; dt is pre-folded into W2 / b2.
    w1x = w1x_ref[...]                                  # (NX, H)
    w2 = w2_ref[...]                                    # (H, NX), scaled by dt
    b2 = jnp.broadcast_to(b2_ref[...], (btile, nx))     # hoisted out of the loop

    x = x_carry[...]
    outs = []
    for j in range(chunk):  # static unroll, capped at `chunk`
        up = uproj[j * btile:(j + 1) * btile, :]        # sublane-aligned slice
        h = jnp.tanh(jnp.dot(x, w1x, preferred_element_type=jnp.float32) + up)
        x = x + jnp.dot(h, w2, preferred_element_type=jnp.float32) + b2
        outs.append(x)

    # One deferred slab store per chunk instead of `chunk` per-step stores.
    xhat_ref[...] = jnp.stack(outs, axis=0)
    x_carry[...] = x


def forward_euler_pallas(x0, u, params, dt, *, chunk=8, btile=8):
    """Full Euler rollout (ahead_step in {0, 1}); returns xhat of shape (N, B, NX)."""
    N, B, NU = u.shape
    _, NX = x0.shape
    w1x, w1u, b1, w2, b2 = params
    H = w1x.shape[1]

    if N == 0:  # zero-step rollout: nothing to integrate, avoid garbage output
        return jnp.zeros((0, B, NX), jnp.float32)

    # Fold dt into the output layer.
    w2_dt = (w2 * dt).astype(jnp.float32)
    b2_dt = (b2 * dt).astype(jnp.float32)

    # Pad batch (sublane dim) to a multiple of btile (>= 8 rows for f32) and
    # the number of steps to a multiple of the chunk size.
    B_pad = ((B + btile - 1) // btile) * btile
    N_pad = ((N + chunk - 1) // chunk) * chunk
    x0_p = jnp.zeros((B_pad, NX), jnp.float32).at[:B].set(x0.astype(jnp.float32))
    u_p = jnp.zeros((N_pad, B_pad, NU), jnp.float32).at[:N, :B].set(u.astype(jnp.float32))

    # (parallel batch tiles, serial time chunks) -- serial axis last.
    grid = (B_pad // btile, N_pad // chunk)

    kernel = functools.partial(_rollout_kernel, chunk=chunk, btile=btile)

    out = pl.pallas_call(
        kernel,
        out_shape=jax.ShapeDtypeStruct((N_pad, B_pad, NX), jnp.float32),
        grid_spec=pltpu.PrefetchScalarGridSpec(
            num_scalar_prefetch=0,
            grid=grid,
            in_specs=[
                pl.BlockSpec((btile, NX), lambda b, c: (b, 0)),            # x0
                pl.BlockSpec((chunk, btile, NU), lambda b, c: (c, b, 0)),  # u
                pl.BlockSpec((NX, H), lambda b, c: (0, 0)),                # W1x
                pl.BlockSpec((NU, H), lambda b, c: (0, 0)),                # W1u
                pl.BlockSpec((1, H), lambda b, c: (0, 0)),                 # b1
                pl.BlockSpec((H, NX), lambda b, c: (0, 0)),                # dt*W2
                pl.BlockSpec((1, NX), lambda b, c: (0, 0)),                # dt*b2
            ],
            out_specs=pl.BlockSpec((chunk, btile, NX), lambda b, c: (c, b, 0)),
            scratch_shapes=[pltpu.VMEM((btile, NX), jnp.float32)],  # carried state
        ),
        compiler_params=pltpu.CompilerParams(
            dimension_semantics=("parallel", "arbitrary")),
    )(x0_p, u_p, w1x.astype(jnp.float32), w1u.astype(jnp.float32),
      b1.astype(jnp.float32), w2_dt, b2_dt)

    return out[:N, :B, :]


def forward_euler_ref(x0, u, params, dt):
    """Pure-JAX reference (mirrors the PyTorch loop)."""
    w1x, w1u, b1, w2, b2 = params

    def model(x, us):
        h = jnp.tanh(x @ w1x + us @ w1u + b1)
        return h @ w2 + b2

    def step(x, us):
        x_new = x + model(x, us) * dt
        return x_new, x_new

    _, xhat = jax.lax.scan(step, x0, u)
    return xhat


if __name__ == "__main__":
    # N=12 with chunk=8 exercises the carried state across two time chunks;
    # B=4 exercises the batch (sublane) padding + output slice-back.
    B, NX, NU, H, N = 4, 8, 3, 32, 12
    dt = 0.1

    key = jax.random.PRNGKey(0)
    k0, k1, k2, k3, k4, k5, k6 = jax.random.split(key, 7)

    x0 = jax.random.normal(k0, (B, NX), dtype=jnp.float32)
    u = jax.random.normal(k1, (N, B, NU), dtype=jnp.float32)

    params = (
        0.3 * jax.random.normal(k2, (NX, H), dtype=jnp.float32),   # W1x
        0.3 * jax.random.normal(k3, (NU, H), dtype=jnp.float32),   # W1u
        0.1 * jax.random.normal(k4, (1, H), dtype=jnp.float32),    # b1
        0.3 * jax.random.normal(k5, (H, NX), dtype=jnp.float32),   # W2
        0.1 * jax.random.normal(k6, (1, NX), dtype=jnp.float32),   # b2
    )

    xhat = forward_euler_pallas(x0, u, params, dt)
    jax.block_until_ready(xhat)

    xhat_ref = forward_euler_ref(x0, u, params, dt)
    assert xhat.shape == (N, B, NX)
    assert jnp.allclose(xhat, xhat_ref, atol=1e-4, rtol=1e-4), "mismatch vs JAX reference"

    print("KERNEL_OK")
</pallas_src>

<mosaic_0001>
module attributes {stable_mosaic.version = 11 : i64} {
  func.func @_rollout_kernel(%arg0: i32, %arg1: i32, %arg2: memref<8x8xf32, #tpu.memory_space<vmem>>, %arg3: memref<8x8x3xf32, #tpu.memory_space<vmem>>, %arg4: memref<8x32xf32, #tpu.memory_space<vmem>>, %arg5: memref<3x32xf32, #tpu.memory_space<vmem>>, %arg6: memref<1x32xf32, #tpu.memory_space<vmem>>, %arg7: memref<32x8xf32, #tpu.memory_space<vmem>>, %arg8: memref<1x8xf32, #tpu.memory_space<vmem>>, %arg9: memref<8x8x8xf32, #tpu.memory_space<vmem>>, %arg10: memref<8x8xf32, #tpu.memory_space<vmem>>) attributes {dimension_semantics = [#tpu.dimension_semantics<parallel>, #tpu.dimension_semantics<arbitrary>], iteration_bounds = array<i64: 1, 2>, scalar_prefetch = 0 : i64, scratch_operands = 1 : i64, tpu.core_type = #tpu.core_type<tc>, window_params = [{transform_indices = @transform_0, window_bounds = array<i64: 8, 8>}, {transform_indices = @transform_1, window_bounds = array<i64: 8, 8, 3>}, {pipeline_mode = #tpu.pipeline_mode<synchronous>, transform_indices = @transform_2, window_bounds = array<i64: 8, 32>}, {pipeline_mode = #tpu.pipeline_mode<synchronous>, transform_indices = @transform_3, window_bounds = array<i64: 3, 32>}, {pipeline_mode = #tpu.pipeline_mode<synchronous>, transform_indices = @transform_4, window_bounds = array<i64: 1, 32>}, {pipeline_mode = #tpu.pipeline_mode<synchronous>, transform_indices = @transform_5, window_bounds = array<i64: 32, 8>}, {pipeline_mode = #tpu.pipeline_mode<synchronous>, transform_indices = @transform_6, window_bounds = array<i64: 1, 8>}, {transform_indices = @transform_7, window_bounds = array<i64: 8, 8, 8>}]} {
    %c0_i32 = arith.constant 0 : i32
    %0 = arith.cmpi eq, %arg1, %c0_i32 : i32
    %1 = arith.extui %0 : i1 to i32
    %c0_i32_0 = arith.constant 0 : i32
    %2 = arith.cmpi ne, %1, %c0_i32_0 : i32
    scf.if %2 {
      %c0_36 = arith.constant 0 : index
      %c0_37 = arith.constant 0 : index
      %83 = vector.load %arg2[%c0_36, %c0_37] : memref<8x8xf32, #tpu.memory_space<vmem>>, vector<8x8xf32>
      %c0_38 = arith.constant 0 : index
      %c0_39 = arith.constant 0 : index
      %84 = vector.load %arg10[%c0_38, %c0_39] : memref<8x8xf32, #tpu.memory_space<vmem>>, vector<8x8xf32>
      tpu.vector_store %arg10[%c0_38, %c0_39], %83 {strides = array<i32>} : memref<8x8xf32, #tpu.memory_space<vmem>>, vector<8x8xf32>,
    } else {
    }
    %c0 = arith.constant 0 : index
    %c0_1 = arith.constant 0 : index
    %c0_2 = arith.constant 0 : index
    %3 = vector.load %arg3[%c0, %c0_1, %c0_2] : memref<8x8x3xf32, #tpu.memory_space<vmem>>, vector<8x8x3xf32>
    %4 = vector.shape_cast %3 : vector<8x8x3xf32> to vector<64x3xf32>
    %c0_3 = arith.constant 0 : index
    %c0_4 = arith.constant 0 : index
    %5 = vector.load %arg5[%c0_3, %c0_4] : memref<3x32xf32, #tpu.memory_space<vmem>>, vector<3x32xf32>
    %cst = arith.constant dense<0.000000e+00> : vector<64x32xf32>
    %6 = tpu.matmul %4, %5, %cst {dimension_numbers = #tpu.dot_dimension_numbers<[1], [0], [0], [1], [0, 0, 1, 1], [], []>} : vector<64x3xf32>, vector<3x32xf32>, vector<64x32xf32> -> vector<64x32xf32>
    %c0_5 = arith.constant 0 : index
    %c0_6 = arith.constant 0 : index
    %7 = vector.load %arg6[%c0_5, %c0_6] : memref<1x32xf32, #tpu.memory_space<vmem>>, vector<1x32xf32>
    %8 = vector.broadcast %7 : vector<1x32xf32> to vector<64x32xf32>
    %9 = arith.addf %6, %8 : vector<64x32xf32>
    %c0_7 = arith.constant 0 : index
    %c0_8 = arith.constant 0 : index
    %10 = vector.load %arg4[%c0_7, %c0_8] : memref<8x32xf32, #tpu.memory_space<vmem>>, vector<8x32xf32>
    %c0_9 = arith.constant 0 : index
    %c0_10 = arith.constant 0 : index
    %11 = vector.load %arg7[%c0_9, %c0_10] : memref<32x8xf32, #tpu.memory_space<vmem>>, vector<32x8xf32>
    %c0_11 = arith.constant 0 : index
    %c0_12 = arith.constant 0 : index
    %12 = vector.load %arg8[%c0_11, %c0_12] : memref<1x8xf32, #tpu.memory_space<vmem>>, vector<1x8xf32>
    %13 = vector.shape_cast %12 : vector<1x8xf32> to vector<1x8xf32>
    %14 = vector.broadcast %13 : vector<1x8xf32> to vector<8x8xf32>
    %c0_13 = arith.constant 0 : index
    %c0_14 = arith.constant 0 : index
    %15 = vector.load %arg10[%c0_13, %c0_14] : memref<8x8xf32, #tpu.memory_space<vmem>>, vector<8x8xf32>
    %16 = vector.extract_strided_slice %9 {offsets = [0, 0], sizes = [8, 32], strides = [1, 1]} : vector<64x32xf32> to vector<8x32xf32>
    %cst_15 = arith.constant dense<0.000000e+00> : vector<8x32xf32>
    %17 = tpu.matmul %15, %10, %cst_15 {dimension_numbers = #tpu.dot_dimension_numbers<[1], [0], [0], [1], [0, 0, 1, 1], [], []>} : vector<8x8xf32>, vector<8x32xf32>, vector<8x32xf32> -> vector<8x32xf32>
    %18 = arith.addf %17, %16 : vector<8x32xf32>
    %19 = math.tanh %18 : vector<8x32xf32>
    %cst_16 = arith.constant dense<0.000000e+00> : vector<8x8xf32>
    %20 = tpu.matmul %19, %11, %cst_16 {dimension_numbers = #tpu.dot_dimension_numbers<[1], [0], [0], [1], [0, 0, 1, 1], [], []>} : vector<8x32xf32>, vector<32x8xf32>, vector<8x8xf32> -> vector<8x8xf32>
    %21 = arith.addf %15, %20 : vector<8x8xf32>
    %22 = arith.addf %21, %14 : vector<8x8xf32>
    %23 = vector.extract_strided_slice %9 {offsets = [8, 0], sizes = [8, 32], strides = [1, 1]} : vector<64x32xf32> to vector<8x32xf32>
    %cst_17 = arith.constant dense<0.000000e+00> : vector<8x32xf32>
    %24 = tpu.matmul %22, %10, %cst_17 {dimension_numbers = #tpu.dot_dimension_numbers<[1], [0], [0], [1], [0, 0, 1, 1], [], []>} : vector<8x8xf32>, vector<8x32xf32>, vector<8x32xf32> -> vector<8x32xf32>
    %25 = arith.addf %24, %23 : vector<8x32xf32>
    %26 = math.tanh %25 : vector<8x32xf32>
    %cst_18 = arith.constant dense<0.000000e+00> : vector<8x8xf32>
    %27 = tpu.matmul %26, %11, %cst_18 {dimension_numbers = #tpu.dot_dimension_numbers<[1], [0], [0], [1], [0, 0, 1, 1], [], []>} : vector<8x32xf32>, vector<32x8xf32>, vector<8x8xf32> -> vector<8x8xf32>
    %28 = arith.addf %22, %27 : vector<8x8xf32>
    %29 = arith.addf %28, %14 : vector<8x8xf32>
    %30 = vector.extract_strided_slice %9 {offsets = [16, 0], sizes = [8, 32], strides = [1, 1]} : vector<64x32xf32> to vector<8x32xf32>
    %cst_19 = arith.constant dense<0.000000e+00> : vector<8x32xf32>
    %31 = tpu.matmul %29, %10, %cst_19 {dimension_numbers = #tpu.dot_dimension_numbers<[1], [0], [0], [1], [0, 0, 1, 1], [], []>} : vector<8x8xf32>, vector<8x32xf32>, vector<8x32xf32> -> vector<8x32xf32>
    %32 = arith.addf %31, %30 : vector<8x32xf32>
    %33 = math.tanh %32 : vector<8x32xf32>
    %cst_20 = arith.constant dense<0.000000e+00> : vector<8x8xf32>
    %34 = tpu.matmul %33, %11, %cst_20 {dimension_numbers = #tpu.dot_dimension_numbers<[1], [0], [0], [1], [0, 0, 1, 1], [], []>} : vector<8x32xf32>, vector<32x8xf32>, vector<8x8xf32> -> vector<8x8xf32>
    %35 = arith.addf %29, %34 : vector<8x8xf32>
    %36 = arith.addf %35, %14 : vector<8x8xf32>
    %37 = vector.extract_strided_slice %9 {offsets = [24, 0], sizes = [8, 32], strides = [1, 1]} : vector<64x32xf32> to vector<8x32xf32>
    %cst_21 = arith.constant dense<0.000000e+00> : vector<8x32xf32>
    %38 = tpu.matmul %36, %10, %cst_21 {dimension_numbers = #tpu.dot_dimension_numbers<[1], [0], [0], [1], [0, 0, 1, 1], [], []>} : vector<8x8xf32>, vector<8x32xf32>, vector<8x32xf32> -> vector<8x32xf32>
    %39 = arith.addf %38, %37 : vector<8x32xf32>
    %40 = math.tanh %39 : vector<8x32xf32>
    %cst_22 = arith.constant dense<0.000000e+00> : vector<8x8xf32>
    %41 = tpu.matmul %40, %11, %cst_22 {dimension_numbers = #tpu.dot_dimension_numbers<[1], [0], [0], [1], [0, 0, 1, 1], [], []>} : vector<8x32xf32>, vector<32x8xf32>, vector<8x8xf32> -> vector<8x8xf32>
    %42 = arith.addf %36, %41 : vector<8x8xf32>
    %43 = arith.addf %42, %14 : vector<8x8xf32>
    %44 = vector.extract_strided_slice %9 {offsets = [32, 0], sizes = [8, 32], strides = [1, 1]} : vector<64x32xf32> to vector<8x32xf32>
    %cst_23 = arith.constant dense<0.000000e+00> : vector<8x32xf32>
    %45 = tpu.matmul %43, %10, %cst_23 {dimension_numbers = #tpu.dot_dimension_numbers<[1], [0], [0], [1], [0, 0, 1, 1], [], []>} : vector<8x8xf32>, vector<8x32xf32>, vector<8x32xf32> -> vector<8x32xf32>
    %46 = arith.addf %45, %44 : vector<8x32xf32>
    %47 = math.tanh %46 : vector<8x32xf32>
    %cst_24 = arith.constant dense<0.000000e+00> : vector<8x8xf32>
    %48 = tpu.matmul %47, %11, %cst_24 {dimension_numbers = #tpu.dot_dimension_numbers<[1], [0], [0], [1], [0, 0, 1, 1], [], []>} : vector<8x32xf32>, vector<32x8xf32>, vector<8x8xf32> -> vector<8x8xf32>
    %49 = arith.addf %43, %48 : vector<8x8xf32>
    %50 = arith.addf %49, %14 : vector<8x8xf32>
    %51 = vector.extract_strided_slice %9 {offsets = [40, 0], sizes = [8, 32], strides = [1, 1]} : vector<64x32xf32> to vector<8x32xf32>
    %cst_25 = arith.constant dense<0.000000e+00> : vector<8x32xf32>
    %52 = tpu.matmul %50, %10, %cst_25 {dimension_numbers = #tpu.dot_dimension_numbers<[1], [0], [0], [1], [0, 0, 1, 1], [], []>} : vector<8x8xf32>, vector<8x32xf32>, vector<8x32xf32> -> vector<8x32xf32>
    %53 = arith.addf %52, %51 : vector<8x32xf32>
    %54 = math.tanh %53 : vector<8x32xf32>
    %cst_26 = arith.constant dense<0.000000e+00> : vector<8x8xf32>
    %55 = tpu.matmul %54, %11, %cst_26 {dimension_numbers = #tpu.dot_dimension_numbers<[1], [0], [0], [1], [0, 0, 1, 1], [], []>} : vector<8x32xf32>, vector<32x8xf32>, vector<8x8xf32> -> vector<8x8xf32>
    %56 = arith.addf %50, %55 : vector<8x8xf32>
    %57 = arith.addf %56, %14 : vector<8x8xf32>
    %58 = vector.extract_strided_slice %9 {offsets = [48, 0], sizes = [8, 32], strides = [1, 1]} : vector<64x32xf32> to vector<8x32xf32>
    %cst_27 = arith.constant dense<0.000000e+00> : vector<8x32xf32>
    %59 = tpu.matmul %57, %10, %cst_27 {dimension_numbers = #tpu.dot_dimension_numbers<[1], [0], [0], [1], [0, 0, 1, 1], [], []>} : vector<8x8xf32>, vector<8x32xf32>, vector<8x32xf32> -> vector<8x32xf32>
    %60 = arith.addf %59, %58 : vector<8x32xf32>
    %61 = math.tanh %60 : vector<8x32xf32>
    %cst_28 = arith.constant dense<0.000000e+00> : vector<8x8xf32>
    %62 = tpu.matmul %61, %11, %cst_28 {dimension_numbers = #tpu.dot_dimension_numbers<[1], [0], [0], [1], [0, 0, 1, 1], [], []>} : vector<8x32xf32>, vector<32x8xf32>, vector<8x8xf32> -> vector<8x8xf32>
    %63 = arith.addf %57, %62 : vector<8x8xf32>
    %64 = arith.addf %63, %14 : vector<8x8xf32>
    %65 = vector.extract_strided_slice %9 {offsets = [56, 0], sizes = [8, 32], strides = [1, 1]} : vector<64x32xf32> to vector<8x32xf32>
    %cst_29 = arith.constant dense<0.000000e+00> : vector<8x32xf32>
    %66 = tpu.matmul %64, %10, %cst_29 {dimension_numbers = #tpu.dot_dimension_numbers<[1], [0], [0], [1], [0, 0, 1, 1], [], []>} : vector<8x8xf32>, vector<8x32xf32>, vector<8x32xf32> -> vector<8x32xf32>
    %67 = arith.addf %66, %65 : vector<8x32xf32>
    %68 = math.tanh %67 : vector<8x32xf32>
    %cst_30 = arith.constant dense<0.000000e+00> : vector<8x8xf32>
    %69 = tpu.matmul %68, %11, %cst_30 {dimension_numbers = #tpu.dot_dimension_numbers<[1], [0], [0], [1], [0, 0, 1, 1], [], []>} : vector<8x32xf32>, vector<32x8xf32>, vector<8x8xf32> -> vector<8x8xf32>
    %70 = arith.addf %64, %69 : vector<8x8xf32>
    %71 = arith.addf %70, %14 : vector<8x8xf32>
    %72 = vector.shape_cast %22 : vector<8x8xf32> to vector<1x8x8xf32>
    %73 = vector.shape_cast %29 : vector<8x8xf32> to vector<1x8x8xf32>
    %74 = vector.shape_cast %36 : vector<8x8xf32> to vector<1x8x8xf32>
    %75 = vector.shape_cast %43 : vector<8x8xf32> to vector<1x8x8xf32>
    %76 = vector.shape_cast %50 : vector<8x8xf32> to vector<1x8x8xf32>
    %77 = vector.shape_cast %57 : vector<8x8xf32> to vector<1x8x8xf32>
    %78 = vector.shape_cast %64 : vector<8x8xf32> to vector<1x8x8xf32>
    %79 = vector.shape_cast %71 : vector<8x8xf32> to vector<1x8x8xf32>
    %80 = tpu.concatenate %72, %73, %74, %75, %76, %77, %78, %79 in 0 : vector<1x8x8xf32>, vector<1x8x8xf32>, vector<1x8x8xf32>, vector<1x8x8xf32>, vector<1x8x8xf32>, vector<1x8x8xf32>, vector<1x8x8xf32>, vector<1x8x8xf32> -> vector<8x8x8xf32>
    %c0_31 = arith.constant 0 : index
    %c0_32 = arith.constant 0 : index
    %c0_33 = arith.constant 0 : index
    %81 = vector.load %arg9[%c0_31, %c0_32, %c0_33] : memref<8x8x8xf32, #tpu.memory_space<vmem>>, vector<8x8x8xf32>
    tpu.vector_store %arg9[%c0_31, %c0_32, %c0_33], %80 {strides = array<i32>} : memref<8x8x8xf32, #tpu.memory_space<vmem>>, vector<8x8x8xf32>,
    %c0_34 = arith.constant 0 : index
    %c0_35 = arith.constant 0 : index
    %82 = vector.load %arg10[%c0_34, %c0_35] : memref<8x8xf32, #tpu.memory_space<vmem>>, vector<8x8xf32>
    tpu.vector_store %arg10[%c0_34, %c0_35], %71 {strides = array<i32>} : memref<8x8xf32, #tpu.memory_space<vmem>>, vector<8x8xf32>,
    return
  }
  func.func @transform_0(%arg0: i32, %arg1: i32) -> (i32, i32) {
    %c0_i32 = arith.constant 0 : i32
    %c0_i32_0 = arith.constant 0 : i32
    return %arg0, %c0_i32 : i32, i32
  }
  func.func @transform_1(%arg0: i32, %arg1: i32) -> (i32, i32, i32) {
    %c0_i32 = arith.constant 0 : i32
    %c0_i32_0 = arith.constant 0 : i32
    return %arg1, %arg0, %c0_i32 : i32, i32, i32
  }
  func.func @transform_2(%arg0: i32, %arg1: i32) -> (i32, i32) {
    %c0_i32 = arith.constant 0 : i32
    %c0_i32_0 = arith.constant 0 : i32
    %c0_i32_1 = arith.constant 0 : i32
    return %c0_i32, %c0_i32_0 : i32, i32
  }
  func.func @transform_3(%arg0: i32, %arg1: i32) -> (i32, i32) {
    %c0_i32 = arith.constant 0 : i32
    %c0_i32_0 = arith.constant 0 : i32
    %c0_i32_1 = arith.constant 0 : i32
    return %c0_i32, %c0_i32_0 : i32, i32
  }
  func.func @transform_4(%arg0: i32, %arg1: i32) -> (i32, i32) {
    %c0_i32 = arith.constant 0 : i32
    %c0_i32_0 = arith.constant 0 : i32
    %c0_i32_1 = arith.constant 0 : i32
    return %c0_i32, %c0_i32_0 : i32, i32
  }
  func.func @transform_5(%arg0: i32, %arg1: i32) -> (i32, i32) {
    %c0_i32 = arith.constant 0 : i32
    %c0_i32_0 = arith.constant 0 : i32
    %c0_i32_1 = arith.constant 0 : i32
    return %c0_i32, %c0_i32_0 : i32, i32
  }
  func.func @transform_6(%arg0: i32, %arg1: i32) -> (i32, i32) {
    %c0_i32 = arith.constant 0 : i32
    %c0_i32_0 = arith.constant 0 : i32
    %c0_i32_1 = arith.constant 0 : i32
    return %c0_i32, %c0_i32_0 : i32, i32
  }
  func.func @transform_7(%arg0: i32, %arg1: i32) -> (i32, i32, i32) {
    %c0_i32 = arith.constant 0 : i32
    %c0_i32_0 = arith.constant 0 : i32
    return %arg1, %arg0, %c0_i32 : i32, i32, i32
  }
}

</mosaic_0001>

<llo_original>
// kernel: tpu_custom_call.1
$region0: #{tpu_custom_call.1}
  #allocation0 [shape = 'u32[]', space=smem, size = 0x4, offset = 0x4, fixed_abs, tag = 'smem constant byte address 0x4 - core index']
  #allocation1 [shape = 'u32[144,128]{1,0:T(1,128)}', space=vmem, size = 0x12000, scoped, tag = 'internal scratch']
  #allocation2 [shape = 'f32[8,8]{1,0:T(8,128)}', space=vmem, size = 0x1000, scoped, tag = 'scratch operand']
  %s0 = inlined_call_operand.vmem [shape: f32[8,8], index: 0, kind: input, shape index: {}]
  %s1 = inlined_call_operand.vmem [shape: f32[16,8,3], index: 1, kind: input, shape index: {}]
  %s2 = inlined_call_operand.vmem [shape: f32[8,32], index: 2, kind: input, shape index: {}]
  %s3 = inlined_call_operand.vmem [shape: f32[3,32], index: 3, kind: input, shape index: {}]
  %s4 = inlined_call_operand.vmem [shape: f32[1,32], index: 4, kind: input, shape index: {}]
  %s5 = inlined_call_operand.vmem [shape: f32[32,8], index: 5, kind: input, shape index: {}]
  %s6 = inlined_call_operand.vmem [shape: f32[1,8], index: 6, kind: input, shape index: {}]
  %s7 = inlined_call_operand.vmem [shape: f32[16,8,8], index: 7, kind: output, shape index: {}]
  %s8 = sld [smem:[#allocation0]]
  $region65: #{tpu_custom_call.1} parent=0
    _
  %s10 = ssub.s32 1, %s8
  %s11 = scalar_select 0, %s10, %s8
  loop: start=0, step=1, limit=4
  $region2: #{tpu_custom_call.1} parent=0 // loop_pre_header
    _
  $region3: #{tpu_custom_call.1} parent=0 // loop_header
    %s13 = sphi 0, %s17
    %p14 = scmp.ge.s32.totalorder %s13, 4
    %s20 = sphi 0, %s32
    %s21 = sphi 0, %s28
    %s22 = sphi 0, %s20
    %s23 = sphi 0, %s21
    %s24 = sphi 0, %s22
    %s25 = sphi 0, %s23
    %s35 = sphi 0, %s37
    %s38 = sphi 0, %s35
    %s39 = sphi 0, %s38
    %s55 = sphi 0, %s39
    %s63 = sphi 0, %s65
    %s66 = sphi 0, %s63
    %s67 = sphi 0, %s66
    %s83 = sphi 0, %s67
    %s87 = sphi 0, %s87
    %s89 = sphi 0, %s87
    %s90 = sphi 0, %s89
    %s104 = sphi 0, %s90
    %s108 = sphi 0, %s108
    %s110 = sphi 0, %s108
    %s111 = sphi 0, %s110
    %s125 = sphi 0, %s111
    %s129 = sphi 0, %s129
    %s131 = sphi 0, %s129
    %s132 = sphi 0, %s131
    %s146 = sphi 0, %s132
    %s150 = sphi 0, %s150
    %s152 = sphi 0, %s150
    %s153 = sphi 0, %s152
    %s167 = sphi 0, %s153
    %s171 = sphi 0, %s171
    %s173 = sphi 0, %s171
    %s174 = sphi 0, %s173
    %s188 = sphi 0, %s174
    %s196 = sphi 0, %s198
    %s199 = sphi 0, %s196
    %s200 = sphi 0, %s199
    %s216 = sphi 0, %s200
  $region4: #{tpu_custom_call.1} parent=0 // loop_header_branch
    %16 = sbr.rel (%p14) target = $region8
  $region5: #{tpu_custom_call.1} parent=0 // loop_body
    %s18 = ssub.s32 %s13, 1
    %s19 = ssub.s32 %s13, 2
    %s26 = sadd.s32 1, %s21
    %p27 = scmp.ge.s32.totalorder %s26, 2
    %s28 = scalar_select %p27, 0, %s26
    %s29 = sadd.s32 1, %s20
    %s30 = scalar_select %p27, %s29, %s20
    %p31 = scmp.ge.s32.totalorder %s30, 1
    %s32 = scalar_select %p31, 0, %s30
    %s33 = ssub.s32 %s20, %s32
    %p34 = scmp.eq.s32.totalorder %s33, 0
    %s36 = sadd.s32 %s35, 1
    %s37 = scalar_select %p34, %s35, %s36
    %p40 = pneg %p34
    %p41 = scmp.eq.s32.totalorder %s13, 1
    %p42 = por %p40, %p41
    %p43 = scmp.ne.s32.totalorder %s35, %s38
    %p44 = scmp.eq.s32.totalorder %s13, 0
    %p45 = por %p43, %p44
    %p46 = scmp.ne.s32.totalorder %s35, %s38
    %p47 = scmp.eq.s32.totalorder %s18, 1
    %p48 = por %p46, %p47
    %p49 = scmp.ne.s32.totalorder %s38, %s39
    %p50 = scmp.eq.s32.totalorder %s18, 0
    %p51 = por %p49, %p50
    %p52 = scmp.ne.s32.totalorder %s38, %s39
    %p53 = scmp.eq.s32.totalorder %s19, 1
    %p54 = por %p52, %p53
    %p56 = scmp.ne.s32.totalorder %s39, %s55
    %p57 = scmp.eq.s32.totalorder %s19, 0
    %p58 = por %p56, %p57
    %s59 = ssub.s32 %s21, %s28
    %s60 = ssub.s32 %s20, %s32
    %s61 = sor.u32 %s59, %s60
    %p62 = scmp.eq.s32.totalorder %s61, 0
    %s64 = sadd.s32 %s63, 1
    %s65 = scalar_select %p62, %s63, %s64
    %p68 = pneg %p62
    %p69 = scmp.eq.s32.totalorder %s13, 1
    %p70 = por %p68, %p69
    %p71 = scmp.ne.s32.totalorder %s63, %s66
    %p72 = scmp.eq.s32.totalorder %s13, 0
    %p73 = por %p71, %p72
    %p74 = scmp.ne.s32.totalorder %s63, %s66
    %p75 = scmp.eq.s32.totalorder %s18, 1
    %p76 = por %p74, %p75
    %p77 = scmp.ne.s32.totalorder %s66, %s67
    %p78 = scmp.eq.s32.totalorder %s18, 0
    %p79 = por %p77, %p78
    %p80 = scmp.ne.s32.totalorder %s66, %s67
    %p81 = scmp.eq.s32.totalorder %s19, 1
    %p82 = por %p80, %p81
    %p84 = scmp.ne.s32.totalorder %s67, %s83
    %p85 = scmp.eq.s32.totalorder %s19, 0
    %p86 = por %p84, %p85
    %s88 = sadd.s32 %s87, 1
    %p91 = scmp.eq.s32.totalorder %s13, 1
    %p92 = scmp.ne.s32.totalorder %s87, %s89
    %p93 = scmp.eq.s32.totalorder %s13, 0
    %p94 = por %p92, %p93
    %p95 = scmp.ne.s32.totalorder %s87, %s89
    %p96 = scmp.eq.s32.totalorder %s18, 1
    %p97 = por %p95, %p96
    %p98 = scmp.ne.s32.totalorder %s89, %s90
    %p99 = scmp.eq.s32.totalorder %s18, 0
    %p100 = por %p98, %p99
    %p101 = scmp.ne.s32.totalorder %s89, %s90
    %p102 = scmp.eq.s32.totalorder %s19, 1
    %p103 = por %p101, %p102
    %p105 = scmp.ne.s32.totalorder %s90, %s104
    %p106 = scmp.eq.s32.totalorder %s19, 0
    %p107 = por %p105, %p106
    %s109 = sadd.s32 %s108, 1
    %p112 = scmp.eq.s32.totalorder %s13, 1
    %p113 = scmp.ne.s32.totalorder %s108, %s110
    %p114 = scmp.eq.s32.totalorder %s13, 0
    %p115 = por %p113, %p114
    %p116 = scmp.ne.s32.totalorder %s108, %s110
    %p117 = scmp.eq.s32.totalorder %s18, 1
    %p118 = por %p116, %p117
    %p119 = scmp.ne.s32.totalorder %s110, %s111
    %p120 = scmp.eq.s32.totalorder %s18, 0
    %p121 = por %p119, %p120
    %p122 = scmp.ne.s32.totalorder %s110, %s111
    %p123 = scmp.eq.s32.totalorder %s19, 1
    %p124 = por %p122, %p123
    %p126 = scmp.ne.s32.totalorder %s111, %s125
    %p127 = scmp.eq.s32.totalorder %s19, 0
    %p128 = por %p126, %p127
    %s130 = sadd.s32 %s129, 1
    %p133 = scmp.eq.s32.totalorder %s13, 1
    %p134 = scmp.ne.s32.totalorder %s129, %s131
    %p135 = scmp.eq.s32.totalorder %s13, 0
    %p136 = por %p134, %p135
    %p137 = scmp.ne.s32.totalorder %s129, %s131
    %p138 = scmp.eq.s32.totalorder %s18, 1
    %p139 = por %p137, %p138
    %p140 = scmp.ne.s32.totalorder %s131, %s132
    %p141 = scmp.eq.s32.totalorder %s18, 0
    %p142 = por %p140, %p141
    %p143 = scmp.ne.s32.totalorder %s131, %s132
    %p144 = scmp.eq.s32.totalorder %s19, 1
    %p145 = por %p143, %p144
    %p147 = scmp.ne.s32.totalorder %s132, %s146
    %p148 = scmp.eq.s32.totalorder %s19, 0
    %p149 = por %p147, %p148
    %s151 = sadd.s32 %s150, 1
    %p154 = scmp.eq.s32.totalorder %s13, 1
    %p155 = scmp.ne.s32.totalorder %s150, %s152
    %p156 = scmp.eq.s32.totalorder %s13, 0
    %p157 = por %p155, %p156
    %p158 = scmp.ne.s32.totalorder %s150, %s152
    %p159 = scmp.eq.s32.totalorder %s18, 1
    %p160 = por %p158, %p159
    %p161 = scmp.ne.s32.totalorder %s152, %s153
    %p162 = scmp.eq.s32.totalorder %s18, 0
    %p163 = por %p161, %p162
    %p164 = scmp.ne.s32.totalorder %s152, %s153
    %p165 = scmp.eq.s32.totalorder %s19, 1
    %p166 = por %p164, %p165
    %p168 = scmp.ne.s32.totalorder %s153, %s167
    %p169 = scmp.eq.s32.totalorder %s19, 0
    %p170 = por %p168, %p169
    %s172 = sadd.s32 %s171, 1
    %p175 = scmp.eq.s32.totalorder %s13, 1
    %p176 = scmp.ne.s32.totalorder %s171, %s173
    %p177 = scmp.eq.s32.totalorder %s13, 0
    %p178 = por %p176, %p177
    %p179 = scmp.ne.s32.totalorder %s171, %s173
    %p180 = scmp.eq.s32.totalorder %s18, 1
    %p181 = por %p179, %p180
    %p182 = scmp.ne.s32.totalorder %s173, %s174
    %p183 = scmp.eq.s32.totalorder %s18, 0
    %p184 = por %p182, %p183
    %p185 = scmp.ne.s32.totalorder %s173, %s174
    %p186 = scmp.eq.s32.totalorder %s19, 1
    %p187 = por %p185, %p186
    %p189 = scmp.ne.s32.totalorder %s174, %s188
    %p190 = scmp.eq.s32.totalorder %s19, 0
    %p191 = por %p189, %p190
    %s192 = ssub.s32 %s21, %s28
    %s193 = ssub.s32 %s20, %s32
    %s194 = sor.u32 %s192, %s193
    %p195 = scmp.eq.s32.totalorder %s194, 0
    %s197 = sadd.s32 %s196, 1
    %s198 = scalar_select %p195, %s196, %s197
    %p201 = pneg %p195
    %p202 = scmp.eq.s32.totalorder %s13, 1
    %p203 = por %p201, %p202
    %p204 = scmp.ne.s32.totalorder %s196, %s199
    %p205 = scmp.eq.s32.totalorder %s13, 0
    %p206 = por %p204, %p205
    %p207 = scmp.ne.s32.totalorder %s196, %s199
    %p208 = scmp.eq.s32.totalorder %s18, 1
    %p209 = por %p207, %p208
    %p210 = scmp.ne.s32.totalorder %s199, %s200
    %p211 = scmp.eq.s32.totalorder %s18, 0
    %p212 = por %p210, %p211
    %p213 = scmp.ne.s32.totalorder %s199, %s200
    %p214 = scmp.eq.s32.totalorder %s19, 1
    %p215 = por %p213, %p214
    %p217 = scmp.ne.s32.totalorder %s200, %s216
    %p218 = scmp.eq.s32.totalorder %s19, 0
    %p219 = por %p217, %p218
    %p220 = scmp.le.s32.totalorder 1, %s13
    %p221 = scmp.lt.s32.totalorder %s13, 3
    %p222 = pnand %p220, %p221
    %p223 = pneg %p222
    // Predicated region
    $region9: #{tpu_custom_call.1} parent=5 // pred_check
      _
    $region10: #{tpu_custom_call.1} parent=5 // pred_check_branch
      %225 = sbr.rel (%p222) target = $region12
    $region11: #{tpu_custom_call.1} parent=5 // pred_region
      %s226 = ssub.s32 %s13, 1
      // Predicated region
      $region13: #{tpu_custom_call.1} parent=11 // pred_check
        %p227 = pneg %p51
      $region14: #{tpu_custom_call.1} parent=11 // pred_check_branch
        %229 = sbr.rel (%p227) target = $region16
      $region15: #{tpu_custom_call.1} parent=11 // pred_region
        %p230 = scmp.lt.s32.totalorder %s22, 0
        %s231 = scalar_select %p230, %s22, 0
        %s232 = smul.addr %s231, 8
        %s233 = scalar_lea.vmem %s0, %s232
      $region16: #{tpu_custom_call.1} parent=11 // pred_fallthru
        _
      // Predicated region
      $region17: #{tpu_custom_call.1} parent=11 // pred_check
        %p234 = pneg %p100
      $region18: #{tpu_custom_call.1} parent=11 // pred_check_branch
        %236 = sbr.rel (%p234) target = $region20
      $region19: #{tpu_custom_call.1} parent=11 // pred_region
        _
      $region20: #{tpu_custom_call.1} parent=11 // pred_fallthru
        _
      // Predicated region
      $region21: #{tpu_custom_call.1} parent=11 // pred_check
        %p237 = pneg %p121
      $region22: #{tpu_custom_call.1} parent=11 // pred_check_branch
        %239 = sbr.rel (%p237) target = $region24
      $region23: #{tpu_custom_call.1} parent=11 // pred_region
        _
      $region24: #{tpu_custom_call.1} parent=11 // pred_fallthru
        _
      // Predicated region
      $region25: #{tpu_custom_call.1} parent=11 // pred_check
        %p240 = pneg %p142
      $region26: #{tpu_custom_call.1} parent=11 // pred_check_branch
        %242 = sbr.rel (%p240) target = $region28
      $region27: #{tpu_custom_call.1} parent=11 // pred_region
        _
      $region28: #{tpu_custom_call.1} parent=11 // pred_fallthru
        _
      // Predicated region
      $region29: #{tpu_custom_call.1} parent=11 // pred_check
        %p243 = pneg %p163
      $region30: #{tpu_custom_call.1} parent=11 // pred_check_branch
        %245 = sbr.rel (%p243) target = $region32
      $region31: #{tpu_custom_call.1} parent=11 // pred_region
        _
      $region32: #{tpu_custom_call.1} parent=11 // pred_fallthru
        _
      // Predicated region
      $region33: #{tpu_custom_call.1} parent=11 // pred_check
        %p246 = pneg %p184
      $region34: #{tpu_custom_call.1} parent=11 // pred_check_branch
        %248 = sbr.rel (%p246) target = $region36
      $region35: #{tpu_custom_call.1} parent=11 // pred_region
        _
      $region36: #{tpu_custom_call.1} parent=11 // pred_fallthru
        _
    $region12: #{tpu_custom_call.1} parent=5 // pred_fallthru
      _
    %p249 = scmp.lt.s32.totalorder %s13, 2
    // Predicated region
    $region37: #{tpu_custom_call.1} parent=5 // pred_check
      %p250 = pneg %p249
    $region38: #{tpu_custom_call.1} parent=5 // pred_check_branch
      %252 = sbr.rel (%p250) target = $region40
    $region39: #{tpu_custom_call.1} parent=5 // pred_region
      // Predicated region
      $region41: #{tpu_custom_call.1} parent=39 // pred_check
        %p253 = pneg %p73
      $region42: #{tpu_custom_call.1} parent=39 // pred_check_branch
        %255 = sbr.rel (%p253) target = $region44
      $region43: #{tpu_custom_call.1} parent=39 // pred_region
        %s256 = smul.u32 8, %s21
        %p257 = scmp.lt.s32.totalorder %s256, 15
        %s258 = scalar_select %p257, %s256, 15
        %p259 = scmp.lt.s32.totalorder %s20, 0
        %s260 = scalar_select %p259, %s20, 0
        %s261 = sadd.s32 %s260, %s258
        %s262 = smul.addr %s261, 8
        %s263 = scalar_lea.vmem %s1, %s262
        %s264 = smul.u32 8, %s21
      $region44: #{tpu_custom_call.1} parent=39 // pred_fallthru
        _
    $region40: #{tpu_custom_call.1} parent=5 // pred_fallthru
      _
    %p265 = scmp.le.s32.totalorder 1, %s13
    %p266 = scmp.lt.s32.totalorder %s13, 3
    %p267 = pnand %p265, %p266
    %p268 = pneg %p267
    // Predicated region
    $region45: #{tpu_custom_call.1} parent=5 // pred_check
      _
    $region46: #{tpu_custom_call.1} parent=5 // pred_check_branch
      %270 = sbr.rel (%p267) target = $region48
    $region47: #{tpu_custom_call.1} parent=5 // pred_region
      %s271 = ssub.s32 %s13, 1
      %p272 = scmp.lt.s32.totalorder %s22, 0
      %s273 = scalar_select %p272, %s22, 0
      %s274 = smul.addr %s273, 8
      %s275 = scalar_lea.vmem %s0, %s274
      %p276 = pneg %p51
      %p277 = pneg %p48
      %s278 = smul.u32 8, %s23
      %p279 = scmp.lt.s32.totalorder %s278, 15
      %s280 = scalar_select %p279, %s278, 15
      %p281 = scmp.lt.s32.totalorder %s22, 0
      %s282 = scalar_select %p281, %s22, 0
      %s283 = sadd.s32 %s282, %s280
      %s284 = smul.addr %s283, 8
      %s285 = scalar_lea.vmem %s1, %s284
      %p286 = pneg %p79
      %p287 = pneg %p76
      %p288 = pneg %p100
      %p289 = pneg %p97
      %p290 = pneg %p121
      %p291 = pneg %p118
      %p292 = pneg %p142
      %p293 = pneg %p139
      %p294 = pneg %p163
      %p295 = pneg %p160
      %p296 = pneg %p184
      %p297 = pneg %p181
      %p298 = pneg %p212
      %p299 = pneg %p209
      %s300 = smul.u32 8, %s23
      %p301 = scmp.lt.s32.totalorder %s300, 15
      %s302 = scalar_select %p301, %s300, 15
      %p303 = scmp.lt.s32.totalorder %s22, 0
      %s304 = scalar_select %p303, %s22, 0
      %s305 = sadd.s32 %s304, %s302
      %s306 = smul.addr %s305, 8
      %s307 = scalar_lea.vmem %s7, %s306
      %p308 = scmp.lt.s32.totalorder %s22, 0
      %s309 = scalar_select %p308, %s22, 0
      %s310 = smul.addr %s309, 8
      %s311 = scalar_lea.vmem %s0, %s310
      %s312 = smul.u32 8, %s23
      %p313 = scmp.lt.s32.totalorder %s312, 15
      %s314 = scalar_select %p313, %s312, 15
      %p315 = scmp.lt.s32.totalorder %s22, 0
      %s316 = scalar_select %p315, %s22, 0
      %s317 = sadd.s32 %s316, %s314
      %s318 = smul.addr %s317, 8
      %s319 = scalar_lea.vmem %s1, %s318
      %s320 = smul.u32 8, %s23
      %s321 = smul.u32 8, %s23
      %p322 = scmp.lt.s32.totalorder %s321, 15
      %s323 = scalar_select %p322, %s321, 15
      %p324 = scmp.lt.s32.totalorder %s22, 0
      %s325 = scalar_select %p324, %s22, 0
      %s326 = sadd.s32 %s325, %s323
      %s327 = smul.addr %s326, 8
      %s328 = scalar_lea.vmem %s7, %s327
      %s329 = smul.u32 8, %s23
      %p330 = scmp.eq.s32.totalorder %s23, 0
      // Predicated region
      $region49: #{tpu_custom_call.1} parent=47 // pred_check
        %p331 = pneg %p330
      $region50: #{tpu_custom_call.1} parent=47 // pred_check_branch
        %333 = sbr.rel (%p331) target = $region52
      $region51: #{tpu_custom_call.1} parent=47 // pred_region
        %v334 = vld [vmem:[%s311] sm:$0xff]
        %vm335 = vcmask 64512
        %336 = vst.msk [vmem:[#allocation2] sm:$0xff] %vm335, %v334
      $region52: #{tpu_custom_call.1} parent=47 // pred_fallthru
        _
      %v337 = vld [vmem:[%s319] sm:$0xff]
      %v338 = vld [vmem:[%s319 + $0x8] sm:$0xff]
      %v339 = vld [vmem:[%s319 + $0x10] sm:$0xff]
      %v340 = vld [vmem:[%s319 + $0x18] sm:$0xff]
      %v341 = vld [vmem:[%s319 + $0x20] sm:$0xff]
      %v342 = vld [vmem:[%s319 + $0x28] sm:$0xff]
      %v343 = vld [vmem:[%s319 + $0x30] sm:$0xff]
      %v344 = vld [vmem:[%s319 + $0x38] sm:$0xff]
      %v345 = vld [vmem:[%s3] sm:$0x7]
      %v346 = vld [vmem:[%s4] sm:$0x1]
      %v348 = vlaneseq
      %v349 = vshrl.u32 %v348, 7
      %v350 = vsub.s32 0, %v349
      %v351 = vrot.slane %v346, %v350
      %vm353 = vcmask 23552
      %v355 = vsel %vm353, %v337, 0
      %v358 = vsel %vm353, %v338, 0
      %v361 = vsel %vm353, %v339, 0
      %v364 = vsel %vm353, %v340, 0
      %v367 = vsel %vm353, %v341, 0
      %v370 = vsel %vm353, %v342, 0
      %v373 = vsel %vm353, %v343, 0
      %v376 = vsel %vm353, %v344, 0
      %vm378 = vcmask 1042432
      %v380 = vsel %vm378, %v345, 0
      %382 = vmatprep.subr.mxu0 0.0
      %383 = vmatpush1.msra.mxu0 %v380
      %384 = vmatprep.subr.mxu0 0.0
      %385 = vmatpush1.msra.mxu0 0.0
      %386 = vmatprep.subr.mxu0 0.0
      %387 = vmatpush1.msra.mxu0 0.0
      %388 = vmatprep.subr.mxu0 0.0
      %389 = vmatpush1.msra.mxu0 0.0
      %390 = vmatprep.subr.mxu0 0.0
      %391 = vmatpush1.msra.mxu0 0.0
      %392 = vmatprep.subr.mxu0 0.0
      %393 = vmatpush1.msra.mxu0 0.0
      %394 = vmatprep.subr.mxu0 0.0
      %395 = vmatpush1.msra.mxu0 0.0
      %396 = vmatprep.subr.mxu0 0.0
      %397 = vmatpush1.msra.mxu0 0.0
      %398 = vmatprep.subr.mxu0 0.0
      %399 = vmatpush1.msra.mxu0 0.0
      %400 = vmatprep.subr.mxu0 0.0
      %401 = vmatpush1.msra.mxu0 0.0
      %402 = vmatprep.subr.mxu0 0.0
      %403 = vmatpush1.msra.mxu0 0.0
      %404 = vmatprep.subr.mxu0 0.0
      %405 = vmatpush1.msra.mxu0 0.0
      %406 = vmatprep.subr.mxu0 0.0
      %407 = vmatpush1.msra.mxu0 0.0
      %408 = vmatprep.subr.mxu0 0.0
      %409 = vmatpush1.msra.mxu0 0.0
      %410 = vmatprep.subr.mxu0 0.0
      %411 = vmatpush1.msra.mxu0 0.0
      %412 = vmatprep.subr.mxu0 0.0
      %413 = vmatpush1.msra.mxu0 0.0
      %414 = vmatprep.subr.mxu0 0.0
      %415 = vmatpush1.msra.mxu0 0.0
      %416 = vmatprep.subr.mxu0 0.0
      %417 = vmatpush1.msra.mxu0 0.0
      %418 = vmatprep.subr.mxu0 0.0
      %419 = vmatpush1.msra.mxu0 0.0
      %420 = vmatprep.subr.mxu0 0.0
      %421 = vmatpush1.msra.mxu0 0.0
      %422 = vmatprep.subr.mxu0 0.0
      %423 = vmatpush1.msra.mxu0 0.0
      %424 = vmatprep.subr.mxu0 0.0
      %425 = vmatpush1.msra.mxu0 0.0
      %426 = vmatprep.subr.mxu0 0.0
      %427 = vmatpush1.msra.mxu0 0.0
      %428 = vmatprep.subr.mxu0 0.0
      %429 = vmatpush1.msra.mxu0 0.0
      %430 = vmatprep.subr.mxu0 0.0
      %431 = vmatpush1.msra.mxu0 0.0
      %432 = vmatprep.subr.mxu0 0.0
      %433 = vmatpush1.msra.mxu0 0.0
      %434 = vmatprep.subr.mxu0 0.0
      %435 = vmatpush1.msra.mxu0 0.0
      %436 = vmatprep.subr.mxu0 0.0
      %437 = vmatpush1.msra.mxu0 0.0
      %438 = vmatprep.subr.mxu0 0.0
      %439 = vmatpush1.msra.mxu0 0.0
      %440 = vmatprep.subr.mxu0 0.0
      %441 = vmatpush1.msra.mxu0 0.0
      %442 = vmatprep.subr.mxu0 0.0
      %443 = vmatpush1.msra.mxu0 0.0
      %444 = vmatprep.subr.mxu0 0.0
      %445 = vmatpush1.msra.mxu0 0.0
      %446 = vmatprep.mubr.f32.mxu0 0.0
      %447 = vmatmul.mubr.f32.gmra.mrb[0].mxu0 %v355
      %v448 = vpop.f32.mrb[0].mxu0
      %v449 = vadd.f32 %v351, %v448
      %v450 = vpop.f32.mrb[0].mxu0
      %451 = vmatprep.mubr.f32.mxu0 0.0
      %452 = vmatmul.mubr.f32.gmra.mrb[0].mxu0 %v358
      %v453 = vpop.f32.mrb[0].mxu0
      %v454 = vadd.f32 %v351, %v453
      %v455 = vpop.f32.mrb[0].mxu0
      %456 = vmatprep.mubr.f32.mxu0 0.0
      %457 = vmatmul.mubr.f32.gmra.mrb[0].mxu0 %v361
      %v458 = vpop.f32.mrb[0].mxu0
      %v459 = vadd.f32 %v351, %v458
      %v460 = vpop.f32.mrb[0].mxu0
      %461 = vmatprep.mubr.f32.mxu0 0.0
      %462 = vmatmul.mubr.f32.gmra.mrb[0].mxu0 %v364
      %v463 = vpop.f32.mrb[0].mxu0
      %v464 = vadd.f32 %v351, %v463
      %v465 = vpop.f32.mrb[0].mxu0
      %466 = vmatprep.mubr.f32.mxu0 0.0
      %467 = vmatmul.mubr.f32.gmra.mrb[0].mxu0 %v367
      %v468 = vpop.f32.mrb[0].mxu0
      %v469 = vadd.f32 %v351, %v468
      %v470 = vpop.f32.mrb[0].mxu0
      %471 = vmatprep.mubr.f32.mxu0 0.0
      %472 = vmatmul.mubr.f32.gmra.mrb[0].mxu0 %v370
      %v473 = vpop.f32.mrb[0].mxu0
      %v474 = vadd.f32 %v351, %v473
      %v475 = vpop.f32.mrb[0].mxu0
      %476 = vmatprep.mubr.f32.mxu0 0.0
      %477 = vmatmul.mubr.f32.gmra.mrb[0].mxu0 %v373
      %v478 = vpop.f32.mrb[0].mxu0
      %v479 = vadd.f32 %v351, %v478
      %v480 = vpop.f32.mrb[0].mxu0
      %481 = vmatprep.mubr.f32.mxu0 0.0
      %482 = vmatmul.mubr.f32.gmra.mrb[0].mxu0 %v376
      %v483 = vpop.f32.mrb[0].mxu0
      %v484 = vadd.f32 %v351, %v483
      %v485 = vpop.f32.mrb[0].mxu0
      %486 = vdwg.mxu0
      %v487 = vld [vmem:[%s2] sm:$0xff]
      %v488 = vld [vmem:[%s5] sm:$0xff]
      %v489 = vld [vmem:[%s5 + $0x8] sm:$0xff]
      %v490 = vld [vmem:[%s5 + $0x10] sm:$0xff]
      %v491 = vld [vmem:[%s5 + $0x18] sm:$0xff]
      %v492 = vld [vmem:[%s6] sm:$0x1]
      %v494 = vlaneseq
      %v495 = vshrl.u32 %v494, 7
      %v496 = vsub.s32 0, %v495
      %v497 = vrot.slane %v492, %v496
      %v499 = vld [vmem:[#allocation2] sm:$0xff]
      %vm500 = vcmask 64512
      %v502 = vsel %vm500, %v499, 0
      %504 = vmatprep.subr.mxu0 0.0
      %505 = vmatpush1.msra.mxu0 %v487
      %506 = vmatprep.subr.mxu0 0.0
      %507 = vmatpush1.msra.mxu0 0.0
      %508 = vmatprep.subr.mxu0 0.0
      %509 = vmatpush1.msra.mxu0 0.0
      %510 = vmatprep.subr.mxu0 0.0
      %511 = vmatpush1.msra.mxu0 0.0
      %512 = vmatprep.subr.mxu0 0.0
      %513 = vmatpush1.msra.mxu0 0.0
      %514 = vmatprep.subr.mxu0 0.0
      %515 = vmatpush1.msra.mxu0 0.0
      %516 = vmatprep.subr.mxu0 0.0
      %517 = vmatpush1.msra.mxu0 0.0
      %518 = vmatprep.subr.mxu0 0.0
      %519 = vmatpush1.msra.mxu0 0.0
      %520 = vmatprep.subr.mxu0 0.0
      %521 = vmatpush1.msra.mxu0 0.0
      %522 = vmatprep.subr.mxu0 0.0
      %523 = vmatpush1.msra.mxu0 0.0
      %524 = vmatprep.subr.mxu0 0.0
      %525 = vmatpush1.msra.mxu0 0.0
      %526 = vmatprep.subr.mxu0 0.0
      %527 = vmatpush1.msra.mxu0 0.0
      %528 = vmatprep.subr.mxu0 0.0
      %529 = vmatpush1.msra.mxu0 0.0
      %530 = vmatprep.subr.mxu0 0.0
      %531 = vmatpush1.msra.mxu0 0.0
      %532 = vmatprep.subr.mxu0 0.0
      %533 = vmatpush1.msra.mxu0 0.0
      %534 = vmatprep.subr.mxu0 0.0
      %535 = vmatpush1.msra.mxu0 0.0
      %536 = vmatprep.subr.mxu0 0.0
      %537 = vmatpush1.msra.mxu0 0.0
      %538 = vmatprep.subr.mxu0 0.0
      %539 = vmatpush1.msra.mxu0 0.0
      %540 = vmatprep.subr.mxu0 0.0
      %541 = vmatpush1.msra.mxu0 0.0
      %542 = vmatprep.subr.mxu0 0.0
      %543 = vmatpush1.msra.mxu0 0.0
      %544 = vmatprep.subr.mxu0 0.0
      %545 = vmatpush1.msra.mxu0 0.0
      %546 = vmatprep.subr.mxu0 0.0
      %547 = vmatpush1.msra.mxu0 0.0
      %548 = vmatprep.subr.mxu0 0.0
      %549 = vmatpush1.msra.mxu0 0.0
      %550 = vmatprep.subr.mxu0 0.0
      %551 = vmatpush1.msra.mxu0 0.0
      %552 = vmatprep.subr.mxu0 0.0
      %553 = vmatpush1.msra.mxu0 0.0
      %554 = vmatprep.subr.mxu0 0.0
      %555 = vmatpush1.msra.mxu0 0.0
      %556 = vmatprep.subr.mxu0 0.0
      %557 = vmatpush1.msra.mxu0 0.0
      %558 = vmatprep.subr.mxu0 0.0
      %559 = vmatpush1.msra.mxu0 0.0
      %560 = vmatprep.subr.mxu0 0.0
      %561 = vmatpush1.msra.mxu0 0.0
      %562 = vmatprep.subr.mxu0 0.0
      %563 = vmatpush1.msra.mxu0 0.0
      %564 = vmatprep.subr.mxu0 0.0
      %565 = vmatpush1.msra.mxu0 0.0
      %566 = vmatprep.subr.mxu0 0.0
      %567 = vmatpush1.msra.mxu0 0.0
      %568 = vmatprep.mubr.f32.mxu0 0.0
      %569 = vmatmul.mubr.f32.gmra.mrb[0].mxu0 %v502
      %v570 = vpop.f32.mrb[0].mxu0
      %v571 = vadd.f32 %v449, %v570
      %v572 = vpop.f32.mrb[0].mxu0
      %573 = vdwg.mxu0
      %v574 = vtanh.pop %v571
      %vm575 = vcmask 261120
      %v577 = vsel %vm575, %v574, 0
      %579 = vmatprep.subr.mxu0 0.0
      %580 = vmatpush1.msra.mxu0 %v488
      %581 = vmatprep.subr.mxu0 0.0
      %582 = vmatpush1.msra.mxu0 %v489
      %583 = vmatprep.subr.mxu0 0.0
      %584 = vmatpush1.msra.mxu0 %v490
      %585 = vmatprep.subr.mxu0 0.0
      %586 = vmatpush1.msra.mxu0 %v491
      %587 = vmatprep.subr.mxu0 0.0
      %588 = vmatpush1.msra.mxu0 0.0
      %589 = vmatprep.subr.mxu0 0.0
      %590 = vmatpush1.msra.mxu0 0.0
      %591 = vmatprep.subr.mxu0 0.0
      %592 = vmatpush1.msra.mxu0 0.0
      %593 = vmatprep.subr.mxu0 0.0
      %594 = vmatpush1.msra.mxu0 0.0
      %595 = vmatprep.subr.mxu0 0.0
      %596 = vmatpush1.msra.mxu0 0.0
      %597 = vmatprep.subr.mxu0 0.0
      %598 = vmatpush1.msra.mxu0 0.0
      %599 = vmatprep.subr.mxu0 0.0
      %600 = vmatpush1.msra.mxu0 0.0
      %601 = vmatprep.subr.mxu0 0.0
      %602 = vmatpush1.msra.mxu0 0.0
      %603 = vmatprep.subr.mxu0 0.0
      %604 = vmatpush1.msra.mxu0 0.0
      %605 = vmatprep.subr.mxu0 0.0
      %606 = vmatpush1.msra.mxu0 0.0
      %607 = vmatprep.subr.mxu0 0.0
      %608 = vmatpush1.msra.mxu0 0.0
      %609 = vmatprep.subr.mxu0 0.0
      %610 = vmatpush1.msra.mxu0 0.0
      %611 = vmatprep.subr.mxu0 0.0
      %612 = vmatpush1.msra.mxu0 0.0
      %613 = vmatprep.subr.mxu0 0.0
      %614 = vmatpush1.msra.mxu0 0.0
      %615 = vmatprep.subr.mxu0 0.0
      %616 = vmatpush1.msra.mxu0 0.0
      %617 = vmatprep.subr.mxu0 0.0
      %618 = vmatpush1.msra.mxu0 0.0
      %619 = vmatprep.subr.mxu0 0.0
      %620 = vmatpush1.msra.mxu0 0.0
      %621 = vmatprep.subr.mxu0 0.0
      %622 = vmatpush1.msra.mxu0 0.0
      %623 = vmatprep.subr.mxu0 0.0
      %624 = vmatpush1.msra.mxu0 0.0
      %625 = vmatprep.subr.mxu0 0.0
      %626 = vmatpush1.msra.mxu0 0.0
      %627 = vmatprep.subr.mxu0 0.0
      %628 = vmatpush1.msra.mxu0 0.0
      %629 = vmatprep.subr.mxu0 0.0
      %630 = vmatpush1.msra.mxu0 0.0
      %631 = vmatprep.subr.mxu0 0.0
      %632 = vmatpush1.msra.mxu0 0.0
      %633 = vmatprep.subr.mxu0 0.0
      %634 = vmatpush1.msra.mxu0 0.0
      %635 = vmatprep.subr.mxu0 0.0
      %636 = vmatpush1.msra.mxu0 0.0
      %637 = vmatprep.subr.mxu0 0.0
      %638 = vmatpush1.msra.mxu0 0.0
      %639 = vmatprep.subr.mxu0 0.0
      %640 = vmatpush1.msra.mxu0 0.0
      %641 = vmatprep.subr.mxu0 0.0
      %642 = vmatpush1.msra.mxu0 0.0
      %643 = vmatprep.mubr.f32.mxu0 0.0
      %644 = vmatmul.mubr.f32.gmra.mrb[0].mxu0 %v577
      %v645 = vpop.f32.mrb[0].mxu0
      %v646 = vadd.f32 0.0, %v645
      %v647 = vpop.f32.mrb[0].mxu0
      %648 = vdwg.mxu0
      %v649 = vadd.f32 %v499, %v646
      %v650 = vadd.f32 %v649, %v497
      %v652 = vsel %vm500, %v650, 0
      %654 = vmatprep.subr.mxu0 0.0
      %655 = vmatpush1.msra.mxu0 %v487
      %656 = vmatprep.subr.mxu0 0.0
      %657 = vmatpush1.msra.mxu0 0.0
      %658 = vmatprep.subr.mxu0 0.0
      %659 = vmatpush1.msra.mxu0 0.0
      %660 = vmatprep.subr.mxu0 0.0
      %661 = vmatpush1.msra.mxu0 0.0
      %662 = vmatprep.subr.mxu0 0.0
      %663 = vmatpush1.msra.mxu0 0.0
      %664 = vmatprep.subr.mxu0 0.0
      %665 = vmatpush1.msra.mxu0 0.0
      %666 = vmatprep.subr.mxu0 0.0
      %667 = vmatpush1.msra.mxu0 0.0
      %668 = vmatprep.subr.mxu0 0.0
      %669 = vmatpush1.msra.mxu0 0.0
      %670 = vmatprep.subr.mxu0 0.0
      %671 = vmatpush1.msra.mxu0 0.0
      %672 = vmatprep.subr.mxu0 0.0
      %673 = vmatpush1.msra.mxu0 0.0
      %674 = vmatprep.subr.mxu0 0.0
      %675 = vmatpush1.msra.mxu0 0.0
      %676 = vmatprep.subr.mxu0 0.0
      %677 = vmatpush1.msra.mxu0 0.0
      %678 = vmatprep.subr.mxu0 0.0
      %679 = vmatpush1.msra.mxu0 0.0
      %680 = vmatprep.subr.mxu0 0.0
      %681 = vmatpush1.msra.mxu0 0.0
      %682 = vmatprep.subr.mxu0 0.0
      %683 = vmatpush1.msra.mxu0 0.0
      %684 = vmatprep.subr.mxu0 0.0
      %685 = vmatpush1.msra.mxu0 0.0
      %686 = vmatprep.subr.mxu0 0.0
      %687 = vmatpush1.msra.mxu0 0.0
      %688 = vmatprep.subr.mxu0 0.0
      %689 = vmatpush1.msra.mxu0 0.0
      %690 = vmatprep.subr.mxu0 0.0
      %691 = vmatpush1.msra.mxu0 0.0
      %692 = vmatprep.subr.mxu0 0.0
      %693 = vmatpush1.msra.mxu0 0.0
      %694 = vmatprep.subr.mxu0 0.0
      %695 = vmatpush1.msra.mxu0 0.0
      %696 = vmatprep.subr.mxu0 0.0
      %697 = vmatpush1.msra.mxu0 0.0
      %698 = vmatprep.subr.mxu0 0.0
      %699 = vmatpush1.msra.mxu0 0.0
      %700 = vmatprep.subr.mxu0 0.0
      %701 = vmatpush1.msra.mxu0 0.0
      %702 = vmatprep.subr.mxu0 0.0
      %703 = vmatpush1.msra.mxu0 0.0
      %704 = vmatprep.subr.mxu0 0.0
      %705 = vmatpush1.msra.mxu0 0.0
      %706 = vmatprep.subr.mxu0 0.0
      %707 = vmatpush1.msra.mxu0 0.0
      %708 = vmatprep.subr.mxu0 0.0
      %709 = vmatpush1.msra.mxu0 0.0
      %710 = vmatprep.subr.mxu0 0.0
      %711 = vmatpush1.msra.mxu0 0.0
      %712 = vmatprep.subr.mxu0 0.0
      %713 = vmatpush1.msra.mxu0 0.0
      %714 = vmatprep.subr.mxu0 0.0
      %715 = vmatpush1.msra.mxu0 0.0
      %716 = vmatprep.subr.mxu0 0.0
      %717 = vmatpush1.msra.mxu0 0.0
      %718 = vmatprep.mubr.f32.mxu0 0.0
      %719 = vmatmul.mubr.f32.gmra.mrb[0].mxu0 %v652
      %v720 = vpop.f32.mrb[0].mxu0
      %v721 = vadd.f32 %v454, %v720
      %v722 = vpop.f32.mrb[0].mxu0
      %723 = vdwg.mxu0
      %v724 = vtanh.pop %v721
      %v726 = vsel %vm575, %v724, 0
      %728 = vmatprep.subr.mxu0 0.0
      %729 = vmatpush1.msra.mxu0 %v488
      %730 = vmatprep.subr.mxu0 0.0
      %731 = vmatpush1.msra.mxu0 %v489
      %732 = vmatprep.subr.mxu0 0.0
      %733 = vmatpush1.msra.mxu0 %v490
      %734 = vmatprep.subr.mxu0 0.0
      %735 = vmatpush1.msra.mxu0 %v491
      %736 = vmatprep.subr.mxu0 0.0
      %737 = vmatpush1.msra.mxu0 0.0
      %738 = vmatprep.subr.mxu0 0.0
      %739 = vmatpush1.msra.mxu0 0.0
      %740 = vmatprep.subr.mxu0 0.0
      %741 = vmatpush1.msra.mxu0 0.0
      %742 = vmatprep.subr.mxu0 0.0
      %743 = vmatpush1.msra.mxu0 0.0
      %744 = vmatprep.subr.mxu0 0.0
      %745 = vmatpush1.msra.mxu0 0.0
      %746 = vmatprep.subr.mxu0 0.0
      %747 = vmatpush1.msra.mxu0 0.0
      %748 = vmatprep.subr.mxu0 0.0
      %749 = vmatpush1.msra.mxu0 0.0
      %750 = vmatprep.subr.mxu0 0.0
      %751 = vmatpush1.msra.mxu0 0.0
      %752 = vmatprep.subr.mxu0 0.0
      %753 = vmatpush1.msra.mxu0 0.0
      %754 = vmatprep.subr.mxu0 0.0
      %755 = vmatpush1.msra.mxu0 0.0
      %756 = vmatprep.subr.mxu0 0.0
      %757 = vmatpush1.msra.mxu0 0.0
      %758 = vmatprep.subr.mxu0 0.0
      %759 = vmatpush1.msra.mxu0 0.0
      %760 = vmatprep.subr.mxu0 0.0
      %761 = vmatpush1.msra.mxu0 0.0
      %762 = vmatprep.subr.mxu0 0.0
      %763 = vmatpush1.msra.mxu0 0.0
      %764 = vmatprep.subr.mxu0 0.0
      %765 = vmatpush1.msra.mxu0 0.0
      %766 = vmatprep.subr.mxu0 0.0
      %767 = vmatpush1.msra.mxu0 0.0
      %768 = vmatprep.subr.mxu0 0.0
      %769 = vmatpush1.msra.mxu0 0.0
      %770 = vmatprep.subr.mxu0 0.0
      %771 = vmatpush1.msra.mxu0 0.0
      %772 = vmatprep.subr.mxu0 0.0
      %773 = vmatpush1.msra.mxu0 0.0
      %774 = vmatprep.subr.mxu0 0.0
      %775 = vmatpush1.msra.mxu0 0.0
      %776 = vmatprep.subr.mxu0 0.0
      %777 = vmatpush1.msra.mxu0 0.0
      %778 = vmatprep.subr.mxu0 0.0
      %779 = vmatpush1.msra.mxu0 0.0
      %780 = vmatprep.subr.mxu0 0.0
      %781 = vmatpush1.msra.mxu0 0.0
      %782 = vmatprep.subr.mxu0 0.0
      %783 = vmatpush1.msra.mxu0 0.0
      %784 = vmatprep.subr.mxu0 0.0
      %785 = vmatpush1.msra.mxu0 0.0
      %786 = vmatprep.subr.mxu0 0.0
      %787 = vmatpush1.msra.mxu0 0.0
      %788 = vmatprep.subr.mxu0 0.0
      %789 = vmatpush1.msra.mxu0 0.0
      %790 = vmatprep.subr.mxu0 0.0
      %791 = vmatpush1.msra.mxu0 0.0
      %792 = vmatprep.mubr.f32.mxu0 0.0
      %793 = vmatmul.mubr.f32.gmra.mrb[0].mxu0 %v726
      %v794 = vpop.f32.mrb[0].mxu0
      %v795 = vadd.f32 0.0, %v794
      %v796 = vpop.f32.mrb[0].mxu0
      %797 = vdwg.mxu0
      %v798 = vadd.f32 %v650, %v795
      %v799 = vadd.f32 %v798, %v497
      %v801 = vsel %vm500, %v799, 0
      %803 = vmatprep.subr.mxu0 0.0
      %804 = vmatpush1.msra.mxu0 %v487
      %805 = vmatprep.subr.mxu0 0.0
      %806 = vmatpush1.msra.mxu0 0.0
      %807 = vmatprep.subr.mxu0 0.0
      %808 = vmatpush1.msra.mxu0 0.0
      %809 = vmatprep.subr.mxu0 0.0
      %810 = vmatpush1.msra.mxu0 0.0
      %811 = vmatprep.subr.mxu0 0.0
      %812 = vmatpush1.msra.mxu0 0.0
      %813 = vmatprep.subr.mxu0 0.0
      %814 = vmatpush1.msra.mxu0 0.0
      %815 = vmatprep.subr.mxu0 0.0
      %816 = vmatpush1.msra.mxu0 0.0
      %817 = vmatprep.subr.mxu0 0.0
      %818 = vmatpush1.msra.mxu0 0.0
      %819 = vmatprep.subr.mxu0 0.0
      %820 = vmatpush1.msra.mxu0 0.0
      %821 = vmatprep.subr.mxu0 0.0
      %822 = vmatpush1.msra.mxu0 0.0
      %823 = vmatprep.subr.mxu0 0.0
      %824 = vmatpush1.msra.mxu0 0.0
      %825 = vmatprep.subr.mxu0 0.0
      %826 = vmatpush1.msra.mxu0 0.0
      %827 = vmatprep.subr.mxu0 0.0
      %828 = vmatpush1.msra.mxu0 0.0
      %829 = vmatprep.subr.mxu0 0.0
      %830 = vmatpush1.msra.mxu0 0.0
      %831 = vmatprep.subr.mxu0 0.0
      %832 = vmatpush1.msra.mxu0 0.0
      %833 = vmatprep.subr.mxu0 0.0
      %834 = vmatpush1.msra.mxu0 0.0
      %835 = vmatprep.subr.mxu0 0.0
      %836 = vmatpush1.msra.mxu0 0.0
      %837 = vmatprep.subr.mxu0 0.0
      %838 = vmatpush1.msra.mxu0 0.0
      %839 = vmatprep.subr.mxu0 0.0
      %840 = vmatpush1.msra.mxu0 0.0
      %841 = vmatprep.subr.mxu0 0.0
      %842 = vmatpush1.msra.mxu0 0.0
      %843 = vmatprep.subr.mxu0 0.0
      %844 = vmatpush1.msra.mxu0 0.0
      %845 = vmatprep.subr.mxu0 0.0
      %846 = vmatpush1.msra.mxu0 0.0
      %847 = vmatprep.subr.mxu0 0.0
      %848 = vmatpush1.msra.mxu0 0.0
      %849 = vmatprep.subr.mxu0 0.0
      %850 = vmatpush1.msra.mxu0 0.0
      %851 = vmatprep.subr.mxu0 0.0
      %852 = vmatpush1.msra.mxu0 0.0
      %853 = vmatprep.subr.mxu0 0.0
      %854 = vmatpush1.msra.mxu0 0.0
      %855 = vmatprep.subr.mxu0 0.0
      %856 = vmatpush1.msra.mxu0 0.0
      %857 = vmatprep.subr.mxu0 0.0
      %858 = vmatpush1.msra.mxu0 0.0
      %859 = vmatprep.subr.mxu0 0.0
      %860 = vmatpush1.msra.mxu0 0.0
      %861 = vmatprep.subr.mxu0 0.0
      %862 = vmatpush1.msra.mxu0 0.0
      %863 = vmatprep.subr.mxu0 0.0
      %864 = vmatpush1.msra.mxu0 0.0
      %865 = vmatprep.subr.mxu0 0.0
      %866 = vmatpush1.msra.mxu0 0.0
      %867 = vmatprep.mubr.f32.mxu0 0.0
      %868 = vmatmul.mubr.f32.gmra.mrb[0].mxu0 %v801
      %v869 = vpop.f32.mrb[0].mxu0
      %v870 = vadd.f32 %v459, %v869
      %v871 = vpop.f32.mrb[0].mxu0
      %872 = vdwg.mxu0
      %v873 = vtanh.pop %v870
      %v875 = vsel %vm575, %v873, 0
      %877 = vmatprep.subr.mxu0 0.0
      %878 = vmatpush1.msra.mxu0 %v488
      %879 = vmatprep.subr.mxu0 0.0
      %880 = vmatpush1.msra.mxu0 %v489
      %881 = vmatprep.subr.mxu0 0.0
      %882 = vmatpush1.msra.mxu0 %v490
      %883 = vmatprep.subr.mxu0 0.0
      %884 = vmatpush1.msra.mxu0 %v491
      %885 = vmatprep.subr.mxu0 0.0
      %886 = vmatpush1.msra.mxu0 0.0
      %887 = vmatprep.subr.mxu0 0.0
      %888 = vmatpush1.msra.mxu0 0.0
      %889 = vmatprep.subr.mxu0 0.0
      %890 = vmatpush1.msra.mxu0 0.0
      %891 = vmatprep.subr.mxu0 0.0
      %892 = vmatpush1.msra.mxu0 0.0
      %893 = vmatprep.subr.mxu0 0.0
      %894 = vmatpush1.msra.mxu0 0.0
      %895 = vmatprep.subr.mxu0 0.0
      %896 = vmatpush1.msra.mxu0 0.0
      %897 = vmatprep.subr.mxu0 0.0
      %898 = vmatpush1.msra.mxu0 0.0
      %899 = vmatprep.subr.mxu0 0.0
      %900 = vmatpush1.msra.mxu0 0.0
      %901 = vmatprep.subr.mxu0 0.0
      %902 = vmatpush1.msra.mxu0 0.0
      %903 = vmatprep.subr.mxu0 0.0
      %904 = vmatpush1.msra.mxu0 0.0
      %905 = vmatprep.subr.mxu0 0.0
      %906 = vmatpush1.msra.mxu0 0.0
      %907 = vmatprep.subr.mxu0 0.0
      %908 = vmatpush1.msra.mxu0 0.0
      %909 = vmatprep.subr.mxu0 0.0
      %910 = vmatpush1.msra.mxu0 0.0
      %911 = vmatprep.subr.mxu0 0.0
      %912 = vmatpush1.msra.mxu0 0.0
      %913 = vmatprep.subr.mxu0 0.0
      %914 = vmatpush1.msra.mxu0 0.0
      %915 = vmatprep.subr.mxu0 0.0
      %916 = vmatpush1.msra.mxu0 0.0
      %917 = vmatprep.subr.mxu0 0.0
      %918 = vmatpush1.msra.mxu0 0.0
      %919 = vmatprep.subr.mxu0 0.0
      %920 = vmatpush1.msra.mxu0 0.0
      %921 = vmatprep.subr.mxu0 0.0
      %922 = vmatpush1.msra.mxu0 0.0
      %923 = vmatprep.subr.mxu0 0.0
      %924 = vmatpush1.msra.mxu0 0.0
      %925 = vmatprep.subr.mxu0 0.0
      %926 = vmatpush1.msra.mxu0 0.0
      %927 = vmatprep.subr.mxu0 0.0
      %928 = vmatpush1.msra.mxu0 0.0
      %929 = vmatprep.subr.mxu0 0.0
      %930 = vmatpush1.msra.mxu0 0.0
      %931 = vmatprep.subr.mxu0 0.0
      %932 = vmatpush1.msra.mxu0 0.0
      %933 = vmatprep.subr.mxu0 0.0
      %934 = vmatpush1.msra.mxu0 0.0
      %935 = vmatprep.subr.mxu0 0.0
      %936 = vmatpush1.msra.mxu0 0.0
      %937 = vmatprep.subr.mxu0 0.0
      %938 = vmatpush1.msra.mxu0 0.0
      %939 = vmatprep.subr.mxu0 0.0
      %940 = vmatpush1.msra.mxu0 0.0
      %941 = vmatprep.mubr.f32.mxu0 0.0
      %942 = vmatmul.mubr.f32.gmra.mrb[0].mxu0 %v875
      %v943 = vpop.f32.mrb[0].mxu0
      %v944 = vadd.f32 0.0, %v943
      %v945 = vpop.f32.mrb[0].mxu0
      %946 = vdwg.mxu0
      %v947 = vadd.f32 %v799, %v944
      %v948 = vadd.f32 %v947, %v497
      %v950 = vsel %vm500, %v948, 0
      %952 = vmatprep.subr.mxu0 0.0
      %953 = vmatpush1.msra.mxu0 %v487
      %954 = vmatprep.subr.mxu0 0.0
      %955 = vmatpush1.msra.mxu0 0.0
      %956 = vmatprep.subr.mxu0 0.0
      %957 = vmatpush1.msra.mxu0 0.0
      %958 = vmatprep.subr.mxu0 0.0
      %959 = vmatpush1.msra.mxu0 0.0
      %960 = vmatprep.subr.mxu0 0.0
      %961 = vmatpush1.msra.mxu0 0.0
      %962 = vmatprep.subr.mxu0 0.0
      %963 = vmatpush1.msra.mxu0 0.0
      %964 = vmatprep.subr.mxu0 0.0
      %965 = vmatpush1.msra.mxu0 0.0
      %966 = vmatprep.subr.mxu0 0.0
      %967 = vmatpush1.msra.mxu0 0.0
      %968 = vmatprep.subr.mxu0 0.0
      %969 = vmatpush1.msra.mxu0 0.0
      %970 = vmatprep.subr.mxu0 0.0
      %971 = vmatpush1.msra.mxu0 0.0
      %972 = vmatprep.subr.mxu0 0.0
      %973 = vmatpush1.msra.mxu0 0.0
      %974 = vmatprep.subr.mxu0 0.0
      %975 = vmatpush1.msra.mxu0 0.0
      %976 = vmatprep.subr.mxu0 0.0
      %977 = vmatpush1.msra.mxu0 0.0
      %978 = vmatprep.subr.mxu0 0.0
      %979 = vmatpush1.msra.mxu0 0.0
      %980 = vmatprep.subr.mxu0 0.0
      %981 = vmatpush1.msra.mxu0 0.0
      %982 = vmatprep.subr.mxu0 0.0
      %983 = vmatpush1.msra.mxu0 0.0
      %984 = vmatprep.subr.mxu0 0.0
      %985 = vmatpush1.msra.mxu0 0.0
      %986 = vmatprep.subr.mxu0 0.0
      %987 = vmatpush1.msra.mxu0 0.0
      %988 = vmatprep.subr.mxu0 0.0
      %989 = vmatpush1.msra.mxu0 0.0
      %990 = vmatprep.subr.mxu0 0.0
      %991 = vmatpush1.msra.mxu0 0.0
      %992 = vmatprep.subr.mxu0 0.0
      %993 = vmatpush1.msra.mxu0 0.0
      %994 = vmatprep.subr.mxu0 0.0
      %995 = vmatpush1.msra.mxu0 0.0
      %996 = vmatprep.subr.mxu0 0.0
      %997 = vmatpush1.msra.mxu0 0.0
      %998 = vmatprep.subr.mxu0 0.0
      %999 = vmatpush1.msra.mxu0 0.0
      %1000 = vmatprep.subr.mxu0 0.0
      %1001 = vmatpush1.msra.mxu0 0.0
      %1002 = vmatprep.subr.mxu0 0.0
      %1003 = vmatpush1.msra.mxu0 0.0
      %1004 = vmatprep.subr.mxu0 0.0
      %1005 = vmatpush1.msra.mxu0 0.0
      %1006 = vmatprep.subr.mxu0 0.0
      %1007 = vmatpush1.msra.mxu0 0.0
      %1008 = vmatprep.subr.mxu0 0.0
      %1009 = vmatpush1.msra.mxu0 0.0
      %1010 = vmatprep.subr.mxu0 0.0
      %1011 = vmatpush1.msra.mxu0 0.0
      %1012 = vmatprep.subr.mxu0 0.0
      %1013 = vmatpush1.msra.mxu0 0.0
      %1014 = vmatprep.subr.mxu0 0.0
      %1015 = vmatpush1.msra.mxu0 0.0
      %1016 = vmatprep.mubr.f32.mxu0 0.0
      %1017 = vmatmul.mubr.f32.gmra.mrb[0].mxu0 %v950
      %v1018 = vpop.f32.mrb[0].mxu0
      %v1019 = vadd.f32 %v464, %v1018
      %v1020 = vpop.f32.mrb[0].mxu0
      %1021 = vdwg.mxu0
      %v1022 = vtanh.pop %v1019
      %v1024 = vsel %vm575, %v1022, 0
      %1026 = vmatprep.subr.mxu0 0.0
      %1027 = vmatpush1.msra.mxu0 %v488
      %1028 = vmatprep.subr.mxu0 0.0
      %1029 = vmatpush1.msra.mxu0 %v489
      %1030 = vmatprep.subr.mxu0 0.0
      %1031 = vmatpush1.msra.mxu0 %v490
      %1032 = vmatprep.subr.mxu0 0.0
      %1033 = vmatpush1.msra.mxu0 %v491
      %1034 = vmatprep.subr.mxu0 0.0
      %1035 = vmatpush1.msra.mxu0 0.0
      %1036 = vmatprep.subr.mxu0 0.0
      %1037 = vmatpush1.msra.mxu0 0.0
      %1038 = vmatprep.subr.mxu0 0.0
      %1039 = vmatpush1.msra.mxu0 0.0
      %1040 = vmatprep.subr.mxu0 0.0
      %1041 = vmatpush1.msra.mxu0 0.0
      %1042 = vmatprep.subr.mxu0 0.0
      %1043 = vmatpush1.msra.mxu0 0.0
      %1044 = vmatprep.subr.mxu0 0.0
      %1045 = vmatpush1.msra.mxu0 0.0
      %1046 = vmatprep.subr.mxu0 0.0
      %1047 = vmatpush1.msra.mxu0 0.0
      %1048 = vmatprep.subr.mxu0 0.0
      %1049 = vmatpush1.msra.mxu0 0.0
      %1050 = vmatprep.subr.mxu0 0.0
      %1051 = vmatpush1.msra.mxu0 0.0
      %1052 = vmatprep.subr.mxu0 0.0
      %1053 = vmatpush1.msra.mxu0 0.0
      %1054 = vmatprep.subr.mxu0 0.0
      %1055 = vmatpush1.msra.mxu0 0.0
      %1056 = vmatprep.subr.mxu0 0.0
      %1057 = vmatpush1.msra.mxu0 0.0
      %1058 = vmatprep.subr.mxu0 0.0
      %1059 = vmatpush1.msra.mxu0 0.0
      %1060 = vmatprep.subr.mxu0 0.0
      %1061 = vmatpush1.msra.mxu0 0.0
      %1062 = vmatprep.subr.mxu0 0.0
      %1063 = vmatpush1.msra.mxu0 0.0
      %1064 = vmatprep.subr.mxu0 0.0
      %1065 = vmatpush1.msra.mxu0 0.0
      %1066 = vmatprep.subr.mxu0 0.0
      %1067 = vmatpush1.msra.mxu0 0.0
      %1068 = vmatprep.subr.mxu0 0.0
      %1069 = vmatpush1.msra.mxu0 0.0
      %1070 = vmatprep.subr.mxu0 0.0
      %1071 = vmatpush1.msra.mxu0 0.0
      %1072 = vmatprep.subr.mxu0 0.0
      %1073 = vmatpush1.msra.mxu0 0.0
      %1074 = vmatprep.subr.mxu0 0.0
      %1075 = vmatpush1.msra.mxu0 0.0
      %1076 = vmatprep.subr.mxu0 0.0
      %1077 = vmatpush1.msra.mxu0 0.0
      %1078 = vmatprep.subr.mxu0 0.0
      %1079 = vmatpush1.msra.mxu0 0.0
      %1080 = vmatprep.subr.mxu0 0.0
      %1081 = vmatpush1.msra.mxu0 0.0
      %1082 = vmatprep.subr.mxu0 0.0
      %1083 = vmatpush1.msra.mxu0 0.0
      %1084 = vmatprep.subr.mxu0 0.0
      %1085 = vmatpush1.msra.mxu0 0.0
      %1086 = vmatprep.subr.mxu0 0.0
      %1087 = vmatpush1.msra.mxu0 0.0
      %1088 = vmatprep.subr.mxu0 0.0
      %1089 = vmatpush1.msra.mxu0 0.0
      %1090 = vmatprep.mubr.f32.mxu0 0.0
      %1091 = vmatmul.mubr.f32.gmra.mrb[0].mxu0 %v1024
      %v1092 = vpop.f32.mrb[0].mxu0
      %v1093 = vadd.f32 0.0, %v1092
      %v1094 = vpop.f32.mrb[0].mxu0
      %1095 = vdwg.mxu0
      %v1096 = vadd.f32 %v948, %v1093
      %v1097 = vadd.f32 %v1096, %v497
      %v1099 = vsel %vm500, %v1097, 0
      %1101 = vmatprep.subr.mxu0 0.0
      %1102 = vmatpush1.msra.mxu0 %v487
      %1103 = vmatprep.subr.mxu0 0.0
      %1104 = vmatpush1.msra.mxu0 0.0
      %1105 = vmatprep.subr.mxu0 0.0
      %1106 = vmatpush1.msra.mxu0 0.0
      %1107 = vmatprep.subr.mxu0 0.0
      %1108 = vmatpush1.msra.mxu0 0.0
      %1109 = vmatprep.subr.mxu0 0.0
      %1110 = vmatpush1.msra.mxu0 0.0
      %1111 = vmatprep.subr.mxu0 0.0
      %1112 = vmatpush1.msra.mxu0 0.0
      %1113 = vmatprep.subr.mxu0 0.0
      %1114 = vmatpush1.msra.mxu0 0.0
      %1115 = vmatprep.subr.mxu0 0.0
      %1116 = vmatpush1.msra.mxu0 0.0
      %1117 = vmatprep.subr.mxu0 0.0
      %1118 = vmatpush1.msra.mxu0 0.0
      %1119 = vmatprep.subr.mxu0 0.0
      %1120 = vmatpush1.msra.mxu0 0.0
      %1121 = vmatprep.subr.mxu0 0.0
      %1122 = vmatpush1.msra.mxu0 0.0
      %1123 = vmatprep.subr.mxu0 0.0
      %1124 = vmatpush1.msra.mxu0 0.0
      %1125 = vmatprep.subr.mxu0 0.0
      %1126 = vmatpush1.msra.mxu0 0.0
      %1127 = vmatprep.subr.mxu0 0.0
      %1128 = vmatpush1.msra.mxu0 0.0
      %1129 = vmatprep.subr.mxu0 0.0
      %1130 = vmatpush1.msra.mxu0 0.0
      %1131 = vmatprep.subr.mxu0 0.0
      %1132 = vmatpush1.msra.mxu0 0.0
      %1133 = vmatprep.subr.mxu0 0.0
      %1134 = vmatpush1.msra.mxu0 0.0
      %1135 = vmatprep.subr.mxu0 0.0
      %1136 = vmatpush1.msra.mxu0 0.0
      %1137 = vmatprep.subr.mxu0 0.0
      %1138 = vmatpush1.msra.mxu0 0.0
      %1139 = vmatprep.subr.mxu0 0.0
      %1140 = vmatpush1.msra.mxu0 0.0
      %1141 = vmatprep.subr.mxu0 0.0
      %1142 = vmatpush1.msra.mxu0 0.0
      %1143 = vmatprep.subr.mxu0 0.0
      %1144 = vmatpush1.msra.mxu0 0.0
      %1145 = vmatprep.subr.mxu0 0.0
      %1146 = vmatpush1.msra.mxu0 0.0
      %1147 = vmatprep.subr.mxu0 0.0
      %1148 = vmatpush1.msra.mxu0 0.0
      %1149 = vmatprep.subr.mxu0 0.0
      %1150 = vmatpush1.msra.mxu0 0.0
      %1151 = vmatprep.subr.mxu0 0.0
      %1152 = vmatpush1.msra.mxu0 0.0
      %1153 = vmatprep.subr.mxu0 0.0
      %1154 = vmatpush1.msra.mxu0 0.0
      %1155 = vmatprep.subr.mxu0 0.0
      %1156 = vmatpush1.msra.mxu0 0.0
      %1157 = vmatprep.subr.mxu0 0.0
      %1158 = vmatpush1.msra.mxu0 0.0
      %1159 = vmatprep.subr.mxu0 0.0
      %1160 = vmatpush1.msra.mxu0 0.0
      %1161 = vmatprep.subr.mxu0 0.0
      %1162 = vmatpush1.msra.mxu0 0.0
      %1163 = vmatprep.subr.mxu0 0.0
      %1164 = vmatpush1.msra.mxu0 0.0
      %1165 = vmatprep.mubr.f32.mxu0 0.0
      %1166 = vmatmul.mubr.f32.gmra.mrb[0].mxu0 %v1099
      %v1167 = vpop.f32.mrb[0].mxu0
      %v1168 = vadd.f32 %v469, %v1167
      %v1169 = vpop.f32.mrb[0].mxu0
      %1170 = vdwg.mxu0
      %v1171 = vtanh.pop %v1168
      %v1173 = vsel %vm575, %v1171, 0
      %1175 = vmatprep.subr.mxu0 0.0
      %1176 = vmatpush1.msra.mxu0 %v488
      %1177 = vmatprep.subr.mxu0 0.0
      %1178 = vmatpush1.msra.mxu0 %v489
      %1179 = vmatprep.subr.mxu0 0.0
      %1180 = vmatpush1.msra.mxu0 %v490
      %1181 = vmatprep.subr.mxu0 0.0
      %1182 = vmatpush1.msra.mxu0 %v491
      %1183 = vmatprep.subr.mxu0 0.0
      %1184 = vmatpush1.msra.mxu0 0.0
      %1185 = vmatprep.subr.mxu0 0.0
      %1186 = vmatpush1.msra.mxu0 0.0
      %1187 = vmatprep.subr.mxu0 0.0
      %1188 = vmatpush1.msra.mxu0 0.0
      %1189 = vmatprep.subr.mxu0 0.0
      %1190 = vmatpush1.msra.mxu0 0.0
      %1191 = vmatprep.subr.mxu0 0.0
      %1192 = vmatpush1.msra.mxu0 0.0
      %1193 = vmatprep.subr.mxu0 0.0
      %1194 = vmatpush1.msra.mxu0 0.0
      %1195 = vmatprep.subr.mxu0 0.0
      %1196 = vmatpush1.msra.mxu0 0.0
      %1197 = vmatprep.subr.mxu0 0.0
      %1198 = vmatpush1.msra.mxu0 0.0
      %1199 = vmatprep.subr.mxu0 0.0
      %1200 = vmatpush1.msra.mxu0 0.0
      %1201 = vmatprep.subr.mxu0 0.0
      %1202 = vmatpush1.msra.mxu0 0.0
      %1203 = vmatprep.subr.mxu0 0.0
      %1204 = vmatpush1.msra.mxu0 0.0
      %1205 = vmatprep.subr.mxu0 0.0
      %1206 = vmatpush1.msra.mxu0 0.0
      %1207 = vmatprep.subr.mxu0 0.0
      %1208 = vmatpush1.msra.mxu0 0.0
      %1209 = vmatprep.subr.mxu0 0.0
      %1210 = vmatpush1.msra.mxu0 0.0
      %1211 = vmatprep.subr.mxu0 0.0
      %1212 = vmatpush1.msra.mxu0 0.0
      %1213 = vmatprep.subr.mxu0 0.0
      %1214 = vmatpush1.msra.mxu0 0.0
      %1215 = vmatprep.subr.mxu0 0.0
      %1216 = vmatpush1.msra.mxu0 0.0
      %1217 = vmatprep.subr.mxu0 0.0
      %1218 = vmatpush1.msra.mxu0 0.0
      %1219 = vmatprep.subr.mxu0 0.0
      %1220 = vmatpush1.msra.mxu0 0.0
      %1221 = vmatprep.subr.mxu0 0.0
      %1222 = vmatpush1.msra.mxu0 0.0
      %1223 = vmatprep.subr.mxu0 0.0
      %1224 = vmatpush1.msra.mxu0 0.0
      %1225 = vmatprep.subr.mxu0 0.0
      %1226 = vmatpush1.msra.mxu0 0.0
      %1227 = vmatprep.subr.mxu0 0.0
      %1228 = vmatpush1.msra.mxu0 0.0
      %1229 = vmatprep.subr.mxu0 0.0
      %1230 = vmatpush1.msra.mxu0 0.0
      %1231 = vmatprep.subr.mxu0 0.0
      %1232 = vmatpush1.msra.mxu0 0.0
      %1233 = vmatprep.subr.mxu0 0.0
      %1234 = vmatpush1.msra.mxu0 0.0
      %1235 = vmatprep.subr.mxu0 0.0
      %1236 = vmatpush1.msra.mxu0 0.0
      %1237 = vmatprep.subr.mxu0 0.0
      %1238 = vmatpush1.msra.mxu0 0.0
      %1239 = vmatprep.mubr.f32.mxu0 0.0
      %1240 = vmatmul.mubr.f32.gmra.mrb[0].mxu0 %v1173
      %v1241 = vpop.f32.mrb[0].mxu0
      %v1242 = vadd.f32 0.0, %v1241
      %v1243 = vpop.f32.mrb[0].mxu0
      %1244 = vdwg.mxu0
      %v1245 = vadd.f32 %v1097, %v1242
      %v1246 = vadd.f32 %v1245, %v497
      %v1248 = vsel %vm500, %v1246, 0
      %1250 = vmatprep.subr.mxu0 0.0
      %1251 = vmatpush1.msra.mxu0 %v487
      %1252 = vmatprep.subr.mxu0 0.0
      %1253 = vmatpush1.msra.mxu0 0.0
      %1254 = vmatprep.subr.mxu0 0.0
      %1255 = vmatpush1.msra.mxu0 0.0
      %1256 = vmatprep.subr.mxu0 0.0
      %1257 = vmatpush1.msra.mxu0 0.0
      %1258 = vmatprep.subr.mxu0 0.0
      %1259 = vmatpush1.msra.mxu0 0.0
      %1260 = vmatprep.subr.mxu0 0.0
      %1261 = vmatpush1.msra.mxu0 0.0
      %1262 = vmatprep.subr.mxu0 0.0
      %1263 = vmatpush1.msra.mxu0 0.0
      %1264 = vmatprep.subr.mxu0 0.0
      %1265 = vmatpush1.msra.mxu0 0.0
      %1266 = vmatprep.subr.mxu0 0.0
      %1267 = vmatpush1.msra.mxu0 0.0
      %1268 = vmatprep.subr.mxu0 0.0
      %1269 = vmatpush1.msra.mxu0 0.0
      %1270 = vmatprep.subr.mxu0 0.0
      %1271 = vmatpush1.msra.mxu0 0.0
      %1272 = vmatprep.subr.mxu0 0.0
      %1273 = vmatpush1.msra.mxu0 0.0
      %1274 = vmatprep.subr.mxu0 0.0
      %1275 = vmatpush1.msra.mxu0 0.0
      %1276 = vmatprep.subr.mxu0 0.0
      %1277 = vmatpush1.msra.mxu0 0.0
      %1278 = vmatprep.subr.mxu0 0.0
      %1279 = vmatpush1.msra.mxu0 0.0
      %1280 = vmatprep.subr.mxu0 0.0
      %1281 = vmatpush1.msra.mxu0 0.0
      %1282 = vmatprep.subr.mxu0 0.0
      %1283 = vmatpush1.msra.mxu0 0.0
      %1284 = vmatprep.subr.mxu0 0.0
      %1285 = vmatpush1.msra.mxu0 0.0
      %1286 = vmatprep.subr.mxu0 0.0
      %1287 = vmatpush1.msra.mxu0 0.0
      %1288 = vmatprep.subr.mxu0 0.0
      %1289 = vmatpush1.msra.mxu0 0.0
      %1290 = vmatprep.subr.mxu0 0.0
      %1291 = vmatpush1.msra.mxu0 0.0
      %1292 = vmatprep.subr.mxu0 0.0
      %1293 = vmatpush1.msra.mxu0 0.0
      %1294 = vmatprep.subr.mxu0 0.0
      %1295 = vmatpush1.msra.mxu0 0.0
      %1296 = vmatprep.subr.mxu0 0.0
      %1297 = vmatpush1.msra.mxu0 0.0
      %1298 = vmatprep.subr.mxu0 0.0
      %1299 = vmatpush1.msra.mxu0 0.0
      %1300 = vmatprep.subr.mxu0 0.0
      %1301 = vmatpush1.msra.mxu0 0.0
      %1302 = vmatprep.subr.mxu0 0.0
      %1303 = vmatpush1.msra.mxu0 0.0
      %1304 = vmatprep.subr.mxu0 0.0
      %1305 = vmatpush1.msra.mxu0 0.0
      %1306 = vmatprep.subr.mxu0 0.0
      %1307 = vmatpush1.msra.mxu0 0.0
      %1308 = vmatprep.subr.mxu0 0.0
      %1309 = vmatpush1.msra.mxu0 0.0
      %1310 = vmatprep.subr.mxu0 0.0
      %1311 = vmatpush1.msra.mxu0 0.0
      %1312 = vmatprep.subr.mxu0 0.0
      %1313 = vmatpush1.msra.mxu0 0.0
      %1314 = vmatprep.mubr.f32.mxu0 0.0
      %1315 = vmatmul.mubr.f32.gmra.mrb[0].mxu0 %v1248
      %v1316 = vpop.f32.mrb[0].mxu0
      %v1317 = vadd.f32 %v474, %v1316
      %v1318 = vpop.f32.mrb[0].mxu0
      %1319 = vdwg.mxu0
      %v1320 = vtanh.pop %v1317
      %v1322 = vsel %vm575, %v1320, 0
      %1324 = vmatprep.subr.mxu0 0.0
      %1325 = vmatpush1.msra.mxu0 %v488
      %1326 = vmatprep.subr.mxu0 0.0
      %1327 = vmatpush1.msra.mxu0 %v489
      %1328 = vmatprep.subr.mxu0 0.0
      %1329 = vmatpush1.msra.mxu0 %v490
      %1330 = vmatprep.subr.mxu0 0.0
      %1331 = vmatpush1.msra.mxu0 %v491
      %1332 = vmatprep.subr.mxu0 0.0
      %1333 = vmatpush1.msra.mxu0 0.0
      %1334 = vmatprep.subr.mxu0 0.0
      %1335 = vmatpush1.msra.mxu0 0.0
      %1336 = vmatprep.subr.mxu0 0.0
      %1337 = vmatpush1.msra.mxu0 0.0
      %1338 = vmatprep.subr.mxu0 0.0
      %1339 = vmatpush1.msra.mxu0 0.0
      %1340 = vmatprep.subr.mxu0 0.0
      %1341 = vmatpush1.msra.mxu0 0.0
      %1342 = vmatprep.subr.mxu0 0.0
      %1343 = vmatpush1.msra.mxu0 0.0
      %1344 = vmatprep.subr.mxu0 0.0
      %1345 = vmatpush1.msra.mxu0 0.0
      %1346 = vmatprep.subr.mxu0 0.0
      %1347 = vmatpush1.msra.mxu0 0.0
      %1348 = vmatprep.subr.mxu0 0.0
      %1349 = vmatpush1.msra.mxu0 0.0
      %1350 = vmatprep.subr.mxu0 0.0
      %1351 = vmatpush1.msra.mxu0 0.0
      %1352 = vmatprep.subr.mxu0 0.0
      %1353 = vmatpush1.msra.mxu0 0.0
      %1354 = vmatprep.subr.mxu0 0.0
      %1355 = vmatpush1.msra.mxu0 0.0
      %1356 = vmatprep.subr.mxu0 0.0
      %1357 = vmatpush1.msra.mxu0 0.0
      %1358 = vmatprep.subr.mxu0 0.0
      %1359 = vmatpush1.msra.mxu0 0.0
      %1360 = vmatprep.subr.mxu0 0.0
      %1361 = vmatpush1.msra.mxu0 0.0
      %1362 = vmatprep.subr.mxu0 0.0
      %1363 = vmatpush1.msra.mxu0 0.0
      %1364 = vmatprep.subr.mxu0 0.0
      %1365 = vmatpush1.msra.mxu0 0.0
      %1366 = vmatprep.subr.mxu0 0.0
      %1367 = vmatpush1.msra.mxu0 0.0
      %1368 = vmatprep.subr.mxu0 0.0
      %1369 = vmatpush1.msra.mxu0 0.0
      %1370 = vmatprep.subr.mxu0 0.0
      %1371 = vmatpush1.msra.mxu0 0.0
      %1372 = vmatprep.subr.mxu0 0.0
      %1373 = vmatpush1.msra.mxu0 0.0
      %1374 = vmatprep.subr.mxu0 0.0
      %1375 = vmatpush1.msra.mxu0 0.0
      %1376 = vmatprep.subr.mxu0 0.0
      %1377 = vmatpush1.msra.mxu0 0.0
      %1378 = vmatprep.subr.mxu0 0.0
      %1379 = vmatpush1.msra.mxu0 0.0
      %1380 = vmatprep.subr.mxu0 0.0
      %1381 = vmatpush1.msra.mxu0 0.0
      %1382 = vmatprep.subr.mxu0 0.0
      %1383 = vmatpush1.msra.mxu0 0.0
      %1384 = vmatprep.subr.mxu0 0.0
      %1385 = vmatpush1.msra.mxu0 0.0
      %1386 = vmatprep.subr.mxu0 0.0
      %1387 = vmatpush1.msra.mxu0 0.0
      %1388 = vmatprep.mubr.f32.mxu0 0.0
      %1389 = vmatmul.mubr.f32.gmra.mrb[0].mxu0 %v1322
      %v1390 = vpop.f32.mrb[0].mxu0
      %v1391 = vadd.f32 0.0, %v1390
      %v1392 = vpop.f32.mrb[0].mxu0
      %1393 = vdwg.mxu0
      %v1394 = vadd.f32 %v1246, %v1391
      %v1395 = vadd.f32 %v1394, %v497
      %v1397 = vsel %vm500, %v1395, 0
      %1399 = vmatprep.subr.mxu0 0.0
      %1400 = vmatpush1.msra.mxu0 %v487
      %1401 = vmatprep.subr.mxu0 0.0
      %1402 = vmatpush1.msra.mxu0 0.0
      %1403 = vmatprep.subr.mxu0 0.0
      %1404 = vmatpush1.msra.mxu0 0.0
      %1405 = vmatprep.subr.mxu0 0.0
      %1406 = vmatpush1.msra.mxu0 0.0
      %1407 = vmatprep.subr.mxu0 0.0
      %1408 = vmatpush1.msra.mxu0 0.0
      %1409 = vmatprep.subr.mxu0 0.0
      %1410 = vmatpush1.msra.mxu0 0.0
      %1411 = vmatprep.subr.mxu0 0.0
      %1412 = vmatpush1.msra.mxu0 0.0
      %1413 = vmatprep.subr.mxu0 0.0
      %1414 = vmatpush1.msra.mxu0 0.0
      %1415 = vmatprep.subr.mxu0 0.0
      %1416 = vmatpush1.msra.mxu0 0.0
      %1417 = vmatprep.subr.mxu0 0.0
      %1418 = vmatpush1.msra.mxu0 0.0
      %1419 = vmatprep.subr.mxu0 0.0
      %1420 = vmatpush1.msra.mxu0 0.0
      %1421 = vmatprep.subr.mxu0 0.0
      %1422 = vmatpush1.msra.mxu0 0.0
      %1423 = vmatprep.subr.mxu0 0.0
      %1424 = vmatpush1.msra.mxu0 0.0
      %1425 = vmatprep.subr.mxu0 0.0
      %1426 = vmatpush1.msra.mxu0 0.0
      %1427 = vmatprep.subr.mxu0 0.0
      %1428 = vmatpush1.msra.mxu0 0.0
      %1429 = vmatprep.subr.mxu0 0.0
      %1430 = vmatpush1.msra.mxu0 0.0
      %1431 = vmatprep.subr.mxu0 0.0
      %1432 = vmatpush1.msra.mxu0 0.0
      %1433 = vmatprep.subr.mxu0 0.0
      %1434 = vmatpush1.msra.mxu0 0.0
      %1435 = vmatprep.subr.mxu0 0.0
      %1436 = vmatpush1.msra.mxu0 0.0
      %1437 = vmatprep.subr.mxu0 0.0
      %1438 = vmatpush1.msra.mxu0 0.0
      %1439 = vmatprep.subr.mxu0 0.0
      %1440 = vmatpush1.msra.mxu0 0.0
      %1441 = vmatprep.subr.mxu0 0.0
      %1442 = vmatpush1.msra.mxu0 0.0
      %1443 = vmatprep.subr.mxu0 0.0
      %1444 = vmatpush1.msra.mxu0 0.0
      %1445 = vmatprep.subr.mxu0 0.0
      %1446 = vmatpush1.msra.mxu0 0.0
      %1447 = vmatprep.subr.mxu0 0.0
      %1448 = vmatpush1.msra.mxu0 0.0
      %1449 = vmatprep.subr.mxu0 0.0
      %1450 = vmatpush1.msra.mxu0 0.0
      %1451 = vmatprep.subr.mxu0 0.0
      %1452 = vmatpush1.msra.mxu0 0.0
      %1453 = vmatprep.subr.mxu0 0.0
      %1454 = vmatpush1.msra.mxu0 0.0
      %1455 = vmatprep.subr.mxu0 0.0
      %1456 = vmatpush1.msra.mxu0 0.0
      %1457 = vmatprep.subr.mxu0 0.0
      %1458 = vmatpush1.msra.mxu0 0.0
      %1459 = vmatprep.subr.mxu0 0.0
      %1460 = vmatpush1.msra.mxu0 0.0
      %1461 = vmatprep.subr.mxu0 0.0
      %1462 = vmatpush1.msra.mxu0 0.0
      %1463 = vmatprep.mubr.f32.mxu0 0.0
      %1464 = vmatmul.mubr.f32.gmra.mrb[0].mxu0 %v1397
      %v1465 = vpop.f32.mrb[0].mxu0
      %v1466 = vadd.f32 %v479, %v1465
      %v1467 = vpop.f32.mrb[0].mxu0
      %1468 = vdwg.mxu0
      %v1469 = vtanh.pop %v1466
      %v1471 = vsel %vm575, %v1469, 0
      %1473 = vmatprep.subr.mxu0 0.0
      %1474 = vmatpush1.msra.mxu0 %v488
      %1475 = vmatprep.subr.mxu0 0.0
      %1476 = vmatpush1.msra.mxu0 %v489
      %1477 = vmatprep.subr.mxu0 0.0
      %1478 = vmatpush1.msra.mxu0 %v490
      %1479 = vmatprep.subr.mxu0 0.0
      %1480 = vmatpush1.msra.mxu0 %v491
      %1481 = vmatprep.subr.mxu0 0.0
      %1482 = vmatpush1.msra.mxu0 0.0
      %1483 = vmatprep.subr.mxu0 0.0
      %1484 = vmatpush1.msra.mxu0 0.0
      %1485 = vmatprep.subr.mxu0 0.0
      %1486 = vmatpush1.msra.mxu0 0.0
      %1487 = vmatprep.subr.mxu0 0.0
      %1488 = vmatpush1.msra.mxu0 0.0
      %1489 = vmatprep.subr.mxu0 0.0
      %1490 = vmatpush1.msra.mxu0 0.0
      %1491 = vmatprep.subr.mxu0 0.0
      %1492 = vmatpush1.msra.mxu0 0.0
      %1493 = vmatprep.subr.mxu0 0.0
      %1494 = vmatpush1.msra.mxu0 0.0
      %1495 = vmatprep.subr.mxu0 0.0
      %1496 = vmatpush1.msra.mxu0 0.0
      %1497 = vmatprep.subr.mxu0 0.0
      %1498 = vmatpush1.msra.mxu0 0.0
      %1499 = vmatprep.subr.mxu0 0.0
      %1500 = vmatpush1.msra.mxu0 0.0
      %1501 = vmatprep.subr.mxu0 0.0
      %1502 = vmatpush1.msra.mxu0 0.0
      %1503 = vmatprep.subr.mxu0 0.0
      %1504 = vmatpush1.msra.mxu0 0.0
      %1505 = vmatprep.subr.mxu0 0.0
      %1506 = vmatpush1.msra.mxu0 0.0
      %1507 = vmatprep.subr.mxu0 0.0
      %1508 = vmatpush1.msra.mxu0 0.0
      %1509 = vmatprep.subr.mxu0 0.0
      %1510 = vmatpush1.msra.mxu0 0.0
      %1511 = vmatprep.subr.mxu0 0.0
      %1512 = vmatpush1.msra.mxu0 0.0
      %1513 = vmatprep.subr.mxu0 0.0
      %1514 = vmatpush1.msra.mxu0 0.0
      %1515 = vmatprep.subr.mxu0 0.0
      %1516 = vmatpush1.msra.mxu0 0.0
      %1517 = vmatprep.subr.mxu0 0.0
      %1518 = vmatpush1.msra.mxu0 0.0
      %1519 = vmatprep.subr.mxu0 0.0
      %1520 = vmatpush1.msra.mxu0 0.0
      %1521 = vmatprep.subr.mxu0 0.0
      %1522 = vmatpush1.msra.mxu0 0.0
      %1523 = vmatprep.subr.mxu0 0.0
      %1524 = vmatpush1.msra.mxu0 0.0
      %1525 = vmatprep.subr.mxu0 0.0
      %1526 = vmatpush1.msra.mxu0 0.0
      %1527 = vmatprep.subr.mxu0 0.0
      %1528 = vmatpush1.msra.mxu0 0.0
      %1529 = vmatprep.subr.mxu0 0.0
      %1530 = vmatpush1.msra.mxu0 0.0
      %1531 = vmatprep.subr.mxu0 0.0
      %1532 = vmatpush1.msra.mxu0 0.0
      %1533 = vmatprep.subr.mxu0 0.0
      %1534 = vmatpush1.msra.mxu0 0.0
      %1535 = vmatprep.subr.mxu0 0.0
      %1536 = vmatpush1.msra.mxu0 0.0
      %1537 = vmatprep.mubr.f32.mxu0 0.0
      %1538 = vmatmul.mubr.f32.gmra.mrb[0].mxu0 %v1471
      %v1539 = vpop.f32.mrb[0].mxu0
      %v1540 = vadd.f32 0.0, %v1539
      %v1541 = vpop.f32.mrb[0].mxu0
      %1542 = vdwg.mxu0
      %v1543 = vadd.f32 %v1395, %v1540
      %v1544 = vadd.f32 %v1543, %v497
      %v1546 = vsel %vm500, %v1544, 0
      %1548 = vmatprep.subr.mxu0 0.0
      %1549 = vmatpush1.msra.mxu0 %v487
      %1550 = vmatprep.subr.mxu0 0.0
      %1551 = vmatpush1.msra.mxu0 0.0
      %1552 = vmatprep.subr.mxu0 0.0
      %1553 = vmatpush1.msra.mxu0 0.0
      %1554 = vmatprep.subr.mxu0 0.0
      %1555 = vmatpush1.msra.mxu0 0.0
      %1556 = vmatprep.subr.mxu0 0.0
      %1557 = vmatpush1.msra.mxu0 0.0
      %1558 = vmatprep.subr.mxu0 0.0
      %1559 = vmatpush1.msra.mxu0 0.0
      %1560 = vmatprep.subr.mxu0 0.0
      %1561 = vmatpush1.msra.mxu0 0.0
      %1562 = vmatprep.subr.mxu0 0.0
      %1563 = vmatpush1.msra.mxu0 0.0
      %1564 = vmatprep.subr.mxu0 0.0
      %1565 = vmatpush1.msra.mxu0 0.0
      %1566 = vmatprep.subr.mxu0 0.0
      %1567 = vmatpush1.msra.mxu0 0.0
      %1568 = vmatprep.subr.mxu0 0.0
      %1569 = vmatpush1.msra.mxu0 0.0
      %1570 = vmatprep.subr.mxu0 0.0
      %1571 = vmatpush1.msra.mxu0 0.0
      %1572 = vmatprep.subr.mxu0 0.0
      %1573 = vmatpush1.msra.mxu0 0.0
      %1574 = vmatprep.subr.mxu0 0.0
      %1575 = vmatpush1.msra.mxu0 0.0
      %1576 = vmatprep.subr.mxu0 0.0
      %1577 = vmatpush1.msra.mxu0 0.0
      %1578 = vmatprep.subr.mxu0 0.0
      %1579 = vmatpush1.msra.mxu0 0.0
      %1580 = vmatprep.subr.mxu0 0.0
      %1581 = vmatpush1.msra.mxu0 0.0
      %1582 = vmatprep.subr.mxu0 0.0
      %1583 = vmatpush1.msra.mxu0 0.0
      %1584 = vmatprep.subr.mxu0 0.0
      %1585 = vmatpush1.msra.mxu0 0.0
      %1586 = vmatprep.subr.mxu0 0.0
      %1587 = vmatpush1.msra.mxu0 0.0
      %1588 = vmatprep.subr.mxu0 0.0
      %1589 = vmatpush1.msra.mxu0 0.0
      %1590 = vmatprep.subr.mxu0 0.0
      %1591 = vmatpush1.msra.mxu0 0.0
      %1592 = vmatprep.subr.mxu0 0.0
      %1593 = vmatpush1.msra.mxu0 0.0
      %1594 = vmatprep.subr.mxu0 0.0
      %1595 = vmatpush1.msra.mxu0 0.0
      %1596 = vmatprep.subr.mxu0 0.0
      %1597 = vmatpush1.msra.mxu0 0.0
      %1598 = vmatprep.subr.mxu0 0.0
      %1599 = vmatpush1.msra.mxu0 0.0
      %1600 = vmatprep.subr.mxu0 0.0
      %1601 = vmatpush1.msra.mxu0 0.0
      %1602 = vmatprep.subr.mxu0 0.0
      %1603 = vmatpush1.msra.mxu0 0.0
      %1604 = vmatprep.subr.mxu0 0.0
      %1605 = vmatpush1.msra.mxu0 0.0
      %1606 = vmatprep.subr.mxu0 0.0
      %1607 = vmatpush1.msra.mxu0 0.0
      %1608 = vmatprep.subr.mxu0 0.0
      %1609 = vmatpush1.msra.mxu0 0.0
      %1610 = vmatprep.subr.mxu0 0.0
      %1611 = vmatpush1.msra.mxu0 0.0
      %1612 = vmatprep.mubr.f32.mxu0 0.0
      %1613 = vmatmul.mubr.f32.gmra.mrb[0].mxu0 %v1546
      %v1614 = vpop.f32.mrb[0].mxu0
      %v1615 = vadd.f32 %v484, %v1614
      %v1616 = vpop.f32.mrb[0].mxu0
      %1617 = vdwg.mxu0
      %v1618 = vtanh.pop %v1615
      %v1620 = vsel %vm575, %v1618, 0
      %1622 = vmatprep.subr.mxu0 0.0
      %1623 = vmatpush1.msra.mxu0 %v488
      %1624 = vmatprep.subr.mxu0 0.0
      %1625 = vmatpush1.msra.mxu0 %v489
      %1626 = vmatprep.subr.mxu0 0.0
      %1627 = vmatpush1.msra.mxu0 %v490
      %1628 = vmatprep.subr.mxu0 0.0
      %1629 = vmatpush1.msra.mxu0 %v491
      %1630 = vmatprep.subr.mxu0 0.0
      %1631 = vmatpush1.msra.mxu0 0.0
      %1632 = vmatprep.subr.mxu0 0.0
      %1633 = vmatpush1.msra.mxu0 0.0
      %1634 = vmatprep.subr.mxu0 0.0
      %1635 = vmatpush1.msra.mxu0 0.0
      %1636 = vmatprep.subr.mxu0 0.0
      %1637 = vmatpush1.msra.mxu0 0.0
      %1638 = vmatprep.subr.mxu0 0.0
      %1639 = vmatpush1.msra.mxu0 0.0
      %1640 = vmatprep.subr.mxu0 0.0
      %1641 = vmatpush1.msra.mxu0 0.0
      %1642 = vmatprep.subr.mxu0 0.0
      %1643 = vmatpush1.msra.mxu0 0.0
      %1644 = vmatprep.subr.mxu0 0.0
      %1645 = vmatpush1.msra.mxu0 0.0
      %1646 = vmatprep.subr.mxu0 0.0
      %1647 = vmatpush1.msra.mxu0 0.0
      %1648 = vmatprep.subr.mxu0 0.0
      %1649 = vmatpush1.msra.mxu0 0.0
      %1650 = vmatprep.subr.mxu0 0.0
      %1651 = vmatpush1.msra.mxu0 0.0
      %1652 = vmatprep.subr.mxu0 0.0
      %1653 = vmatpush1.msra.mxu0 0.0
      %1654 = vmatprep.subr.mxu0 0.0
      %1655 = vmatpush1.msra.mxu0 0.0
      %1656 = vmatprep.subr.mxu0 0.0
      %1657 = vmatpush1.msra.mxu0 0.0
      %1658 = vmatprep.subr.mxu0 0.0
      %1659 = vmatpush1.msra.mxu0 0.0
      %1660 = vmatprep.subr.mxu0 0.0
      %1661 = vmatpush1.msra.mxu0 0.0
      %1662 = vmatprep.subr.mxu0 0.0
      %1663 = vmatpush1.msra.mxu0 0.0
      %1664 = vmatprep.subr.mxu0 0.0
      %1665 = vmatpush1.msra.mxu0 0.0
      %1666 = vmatprep.subr.mxu0 0.0
      %1667 = vmatpush1.msra.mxu0 0.0
      %1668 = vmatprep.subr.mxu0 0.0
      %1669 = vmatpush1.msra.mxu0 0.0
      %1670 = vmatprep.subr.mxu0 0.0
      %1671 = vmatpush1.msra.mxu0 0.0
      %1672 = vmatprep.subr.mxu0 0.0
      %1673 = vmatpush1.msra.mxu0 0.0
      %1674 = vmatprep.subr.mxu0 0.0
      %1675 = vmatpush1.msra.mxu0 0.0
      %1676 = vmatprep.subr.mxu0 0.0
      %1677 = vmatpush1.msra.mxu0 0.0
      %1678 = vmatprep.subr.mxu0 0.0
      %1679 = vmatpush1.msra.mxu0 0.0
      %1680 = vmatprep.subr.mxu0 0.0
      %1681 = vmatpush1.msra.mxu0 0.0
      %1682 = vmatprep.subr.mxu0 0.0
      %1683 = vmatpush1.msra.mxu0 0.0
      %1684 = vmatprep.subr.mxu0 0.0
      %1685 = vmatpush1.msra.mxu0 0.0
      %1686 = vmatprep.mubr.f32.mxu0 0.0
      %1687 = vmatmul.mubr.f32.gmra.mrb[0].mxu0 %v1620
      %v1688 = vpop.f32.mrb[0].mxu0
      %v1689 = vadd.f32 0.0, %v1688
      %v1690 = vpop.f32.mrb[0].mxu0
      %1691 = vdwg.mxu0
      %v1692 = vadd.f32 %v1544, %v1689
      %v1693 = vadd.f32 %v1692, %v497
      %1694 = vst.msk [vmem:[%s328] sm:$0xff] %vm500, %v650
      %1695 = vst.msk [vmem:[%s328 + $0x8] sm:$0xff] %vm500, %v799
      %1696 = vst.msk [vmem:[%s328 + $0x10] sm:$0xff] %vm500, %v948
      %1697 = vst.msk [vmem:[%s328 + $0x18] sm:$0xff] %vm500, %v1097
      %1698 = vst.msk [vmem:[%s328 + $0x20] sm:$0xff] %vm500, %v1246
      %1699 = vst.msk [vmem:[%s328 + $0x28] sm:$0xff] %vm500, %v1395
      %1700 = vst.msk [vmem:[%s328 + $0x30] sm:$0xff] %vm500, %v1544
      %1701 = vst.msk [vmem:[%s328 + $0x38] sm:$0xff] %vm500, %v1693
      %1702 = vst.msk [vmem:[#allocation2] sm:$0xff] %vm500, %v1693
      %s1703 = smul.u32 8, %s23
      %p1704 = scmp.lt.s32.totalorder %s1703, 15
      %s1705 = scalar_select %p1704, %s1703, 15
      %p1706 = scmp.lt.s32.totalorder %s22, 0
      %s1707 = scalar_select %p1706, %s22, 0
      %s1708 = sadd.s32 %s1707, %s1705
      %s1709 = smul.addr %s1708, 8
      %s1710 = scalar_lea.vmem %s7, %s1709
      // Predicated region
      $region53: #{tpu_custom_call.1} parent=47 // pred_check
        %p1711 = pneg %p209
      $region54: #{tpu_custom_call.1} parent=47 // pred_check_branch
        %1713 = sbr.rel (%p1711) target = $region56
      $region55: #{tpu_custom_call.1} parent=47 // pred_region
        %s1714 = smul.u32 8, %s23
      $region56: #{tpu_custom_call.1} parent=47 // pred_fallthru
        _
    $region48: #{tpu_custom_call.1} parent=5 // pred_fallthru
      _
    %p1715 = scmp.le.s32.totalorder 2, %s13
    // Predicated region
    $region57: #{tpu_custom_call.1} parent=5 // pred_check
      %p1716 = pneg %p1715
    $region58: #{tpu_custom_call.1} parent=5 // pred_check_branch
      %1718 = sbr.rel (%p1716) target = $region60
    $region59: #{tpu_custom_call.1} parent=5 // pred_region
      %s1719 = ssub.s32 %s13, 2
      // Predicated region
      $region61: #{tpu_custom_call.1} parent=59 // pred_check
        %p1720 = pneg %p215
      $region62: #{tpu_custom_call.1} parent=59 // pred_check_branch
        %1722 = sbr.rel (%p1720) target = $region64
      $region63: #{tpu_custom_call.1} parent=59 // pred_region
        %s1723 = smul.u32 8, %s25
        %p1724 = scmp.lt.s32.totalorder %s1723, 15
        %s1725 = scalar_select %p1724, %s1723, 15
        %p1726 = scmp.lt.s32.totalorder %s24, 0
        %s1727 = scalar_select %p1726, %s24, 0
        %s1728 = sadd.s32 %s1727, %s1725
        %s1729 = smul.addr %s1728, 8
        %s1730 = scalar_lea.vmem %s7, %s1729
      $region64: #{tpu_custom_call.1} parent=59 // pred_fallthru
        _
    $region60: #{tpu_custom_call.1} parent=5 // pred_fallthru
      _
  $region6: #{tpu_custom_call.1} parent=0 // loop_footer
    %s17 = sadd.s32 1, %s13
  $region7: #{tpu_custom_call.1} parent=0 // loop_footer_branch
    %12 = sbr.rel target = $region3
  $region8: #{tpu_custom_call.1} parent=0 // loop_exit
    _

</llo_original>
